<compile_context>
chip_gen: v7x
topology: tpu7x:2x2x1
jax: 0.10.0
libtpu: 0.0.40
codegen_flags: <defaults>
</compile_context>

<pallas_src>
import numpy as np
import jax
import jax.numpy as jnp
from jax.experimental import pallas as pl
from jax.experimental.pallas import tpu as pltpu

NEG_SLOPE = 0.01  # nn.LeakyReLU() default negative_slope


def _bilinear_matrix(in_size, out_size):
    """1-D interpolation matrix matching nn.Upsample(mode='bilinear', align_corners=False)."""
    scale = in_size / out_size
    dst = np.arange(out_size, dtype=np.float64)
    src = np.maximum((dst + 0.5) * scale - 0.5, 0.0)
    i0 = np.minimum(np.floor(src).astype(np.int64), in_size - 1)
    i1 = np.minimum(i0 + 1, in_size - 1)
    lam = src - i0
    m = np.zeros((out_size, in_size), dtype=np.float64)
    m[np.arange(out_size), i0] += 1.0 - lam
    m[np.arange(out_size), i1] += lam
    return m.astype(np.float32)


def _width_shift_indicators(W, k, pad):
    """S[dw, a, b] = 1 iff input column a == output column b + dw - pad (zero pad outside)."""
    s = np.zeros((k, W, W), dtype=np.float32)
    for dw in range(k):
        for b in range(W):
            a = b + dw - pad
            if 0 <= a < W:
                s[dw, a, b] = 1.0
    return s


def _upconv_kernel(x_ref, mhp_ref, mwint_ref, wres_ref, bres_ref,
                   m1_ref, b1_ref, m2_ref, b2_ref, out_ref):
    # x_ref    : (1, Hin, Win*Ci)   original (pre-upsample) activation, channels interleaved on lanes
    # mhp_ref  : (H+6, Hin)         height upsample matrix with 3 built-in zero halo rows top/bottom
    # mwint_ref: (Win*Ci, W*Ci)     width upsample + channel interleave matrix
    # wres_ref : (W*Ci, W*Co)       block-diagonal 1x1 residual conv
    # m1_ref   : (5, W*Ci, W*Co)    banded 5x5 conv tap matrices (width pad folded in)
    # m2_ref   : (3, W*Co, W*Co)    banded 3x3 conv tap matrices
    # b*_ref   : (1, W*Co)          biases tiled over width
    # out_ref  : (1, H, W*Co)       lane-dense output
    H = out_ref.shape[1]
    WCo = out_ref.shape[2]
    f32 = jnp.float32

    x = x_ref[0]                                                      # (Hin, Win*Ci)

    # Fused bilinear upsample: width (+ interleave) then height; vertical zero halo is
    # born inside the matmul because mhp's first/last 3 rows are zero.
    xw = jnp.dot(x, mwint_ref[...], preferred_element_type=f32)       # (Hin, W*Ci)
    up_pad = jnp.dot(mhp_ref[...], xw, preferred_element_type=f32)    # (H+6, W*Ci)

    # Residual 1x1 conv as one block-diagonal matmul, lane-dense (H, W*Co).
    up = up_pad[3:3 + H, :]
    res = jnp.dot(up, wres_ref[...], preferred_element_type=f32) + bres_ref[...]

    # conv1: 5x5, pad=2 -> 5 banded matmuls (one per vertical tap). Computed on H+2 rows
    # so the 3x3 conv's 1-row halo is available in registers.
    acc1 = jnp.dot(up_pad[0:H + 2, :], m1_ref[0], preferred_element_type=f32)
    for dh in range(1, 5):
        acc1 = acc1 + jnp.dot(up_pad[dh:dh + H + 2, :], m1_ref[dh],
                              preferred_element_type=f32)
    y = acc1 + b1_ref[...]
    y = jnp.where(y >= 0, y, NEG_SLOPE * y)                           # LeakyReLU (f32 VPU)
    # Rows 0 and H+1 are out-of-image conv1 rows; force them to the 3x3 conv's zero padding.
    row = jax.lax.broadcasted_iota(jnp.int32, (H + 2, WCo), 0)
    y = jnp.where(jnp.logical_or(row == 0, row == H + 1), 0.0, y)     # (H+2, W*Co)

    # conv2: 3x3, pad=1 -> 3 banded matmuls, halo already in registers (no scratch round-trip).
    acc2 = jnp.dot(y[0:H, :], m2_ref[0], preferred_element_type=f32)
    for dh in range(1, 3):
        acc2 = acc2 + jnp.dot(y[dh:dh + H, :], m2_ref[dh],
                              preferred_element_type=f32)

    out_ref[0] = acc2 + b2_ref[...] + res                             # lane-dense store


def upconv_block(x_nchw, params, r):
    """Forward of UpConvBlockInternal.  x_nchw: (N, Ci, Hin, Win) -> (N, Co, Hin*r, Win*r)."""
    wres, bres, w1, b1, w2, b2 = params
    N, Ci, Hin, Win = x_nchw.shape
    H, W = Hin * r, Win * r
    Co = wres.shape[1]
    f32 = jnp.float32

    # ---- constant operator matrices (depend only on static sizes; built with numpy) ----
    mh = _bilinear_matrix(Hin, H)                                     # (H, Hin)
    mw = _bilinear_matrix(Win, W)                                     # (W, Win)
    mhp = np.zeros((H + 6, Hin), np.float32)                          # + 3-row zero halo
    mhp[3:3 + H] = mh
    mwint = np.kron(mw.T, np.eye(Ci, dtype=np.float32))               # (Win*Ci, W*Ci)
    s1 = _width_shift_indicators(W, 5, 2)                             # (5, W, W)
    s2 = _width_shift_indicators(W, 3, 1)                             # (3, W, W)

    # ---- weight-dependent operator matrices (tiny, traceable jnp ops) ----
    wres_bd = jnp.kron(jnp.eye(W, dtype=f32), wres.astype(f32))                        # (W*Ci, W*Co)
    m1 = jnp.einsum('dab,hdio->haibo', s1, w1.astype(f32)).reshape(5, W * Ci, W * Co)  # banded 5x5
    m2 = jnp.einsum('dab,hdio->haibo', s2, w2.astype(f32)).reshape(3, W * Co, W * Co)  # banded 3x3
    bres_row = jnp.tile(bres.astype(f32), (1, W))                                      # (1, W*Co)
    b1_row = jnp.tile(b1.astype(f32), (1, W))
    b2_row = jnp.tile(b2.astype(f32), (1, W))

    # Single cheap relayout of the SMALL pre-upsample input; the much larger upsampled
    # activation is produced inside the kernel and never materialized in HBM.
    x_in = jnp.transpose(x_nchw.astype(f32), (0, 2, 3, 1)).reshape(N, Hin, Win * Ci)

    # NOTE: at production resolutions, add an H-tiling "parallel" grid axis with a small
    # row halo so v7x's two TensorCores and its 64 MiB VMEM are covered; a whole-image
    # block per batch element is fine at these sizes.
    out2d = pl.pallas_call(
        _upconv_kernel,
        out_shape=jax.ShapeDtypeStruct((N, H, W * Co), f32),
        grid=(N,),
        in_specs=[
            pl.BlockSpec((1, Hin, Win * Ci), lambda n: (n, 0, 0)),
            pl.BlockSpec((H + 6, Hin), lambda n: (0, 0)),
            pl.BlockSpec((Win * Ci, W * Ci), lambda n: (0, 0)),
            pl.BlockSpec((W * Ci, W * Co), lambda n: (0, 0)),
            pl.BlockSpec((1, W * Co), lambda n: (0, 0)),
            pl.BlockSpec((5, W * Ci, W * Co), lambda n: (0, 0, 0)),
            pl.BlockSpec((1, W * Co), lambda n: (0, 0)),
            pl.BlockSpec((3, W * Co, W * Co), lambda n: (0, 0, 0)),
            pl.BlockSpec((1, W * Co), lambda n: (0, 0)),
        ],
        out_specs=pl.BlockSpec((1, H, W * Co), lambda n: (n, 0, 0)),
        compiler_params=pltpu.CompilerParams(
            dimension_semantics=("parallel",),
            vmem_limit_bytes=32 * 1024 * 1024),
    )(x_in, jnp.asarray(mhp), jnp.asarray(mwint), wres_bd, bres_row,
      m1, b1_row, m2, b2_row)

    # (N, H, W*Co) is contiguous NHWC; only the final NCHW transpose is left to XLA.
    return jnp.transpose(out2d.reshape(N, H, W, Co), (0, 3, 1, 2))


def ref_forward(x_nchw, params, r):
    """Pure-JAX reference (same math, XLA convs) for verification."""
    wres, bres, w1, b1, w2, b2 = params
    N, Ci, Hin, Win = x_nchw.shape
    H, W = Hin * r, Win * r
    mh = jnp.asarray(_bilinear_matrix(Hin, H))
    mw = jnp.asarray(_bilinear_matrix(Win, W))
    up = jnp.einsum('oi,ncij,pj->ncop', mh, x_nchw, mw)
    x = jnp.transpose(up, (0, 2, 3, 1))                      # NHWC
    res = jnp.einsum('nhwc,co->nhwo', x, wres) + bres[0]
    dn1 = jax.lax.conv_dimension_numbers(x.shape, w1.shape, ('NHWC', 'HWIO', 'NHWC'))
    y = jax.lax.conv_general_dilated(x, w1, (1, 1), 'SAME', dimension_numbers=dn1) + b1[0]
    y = jnp.where(y >= 0, y, NEG_SLOPE * y)
    dn2 = jax.lax.conv_dimension_numbers(y.shape, w2.shape, ('NHWC', 'HWIO', 'NHWC'))
    y = jax.lax.conv_general_dilated(y, w2, (1, 1), 'SAME', dimension_numbers=dn2) + b2[0]
    return jnp.transpose(y + res, (0, 3, 1, 2))              # NCHW


if __name__ == "__main__":
    # Small shapes: batch=2, c_i=4, c_o=8, spatial=8x8, upsample factor r=2 -> 16x16 output.
    N, Ci, Co, Hin, Win, r = 2, 4, 8, 8, 8, 2

    key = jax.random.PRNGKey(0)
    ks = jax.random.split(key, 7)
    x = jax.random.normal(ks[0], (N, Ci, Hin, Win), jnp.float32)
    # Deterministic synthetic parameters (shapes follow nn.Conv2d in the module).
    wres = jax.random.normal(ks[1], (Ci, Co), jnp.float32) * 0.2      # res_conv 1x1
    bres = jax.random.normal(ks[2], (1, Co), jnp.float32) * 0.1
    w1 = jax.random.normal(ks[3], (5, 5, Ci, Co), jnp.float32) * 0.1  # seq[0] 5x5
    b1 = jax.random.normal(ks[4], (1, Co), jnp.float32) * 0.1
    w2 = jax.random.normal(ks[5], (3, 3, Co, Co), jnp.float32) * 0.1  # seq[2] 3x3
    b2 = jax.random.normal(ks[6], (1, Co), jnp.float32) * 0.1
    params = (wres, bres, w1, b1, w2, b2)

    fwd = jax.jit(upconv_block, static_argnums=(2,))
    out = jax.block_until_ready(fwd(x, params, r))
    assert out.shape == (N, Co, Hin * r, Win * r)
    assert out.dtype == jnp.float32

    ref = ref_forward(x, params, r)
    np.testing.assert_allclose(np.asarray(out), np.asarray(ref), rtol=1e-4, atol=1e-4)

    print("KERNEL_OK")
</pallas_src>

<mosaic_0001>
module attributes {stable_mosaic.version = 11 : i64} {
  func.func @_upconv_kernel(%arg0: i32, %arg1: memref<1x8x32xf32, #tpu.memory_space<vmem>>, %arg2: memref<22x8xf32, #tpu.memory_space<vmem>>, %arg3: memref<32x64xf32, #tpu.memory_space<vmem>>, %arg4: memref<64x128xf32, #tpu.memory_space<vmem>>, %arg5: memref<1x128xf32, #tpu.memory_space<vmem>>, %arg6: memref<5x64x128xf32, #tpu.memory_space<vmem>>, %arg7: memref<1x128xf32, #tpu.memory_space<vmem>>, %arg8: memref<3x128x128xf32, #tpu.memory_space<vmem>>, %arg9: memref<1x128xf32, #tpu.memory_space<vmem>>, %arg10: memref<1x16x128xf32, #tpu.memory_space<vmem>>) attributes {dimension_semantics = [#tpu.dimension_semantics<parallel>], iteration_bounds = array<i64: 2>, scalar_prefetch = 0 : i64, scratch_operands = 0 : i64, tpu.core_type = #tpu.core_type<tc>, window_params = [{transform_indices = @transform_0, window_bounds = array<i64: 1, 8, 32>}, {pipeline_mode = #tpu.pipeline_mode<synchronous>, transform_indices = @transform_1, window_bounds = array<i64: 22, 8>}, {pipeline_mode = #tpu.pipeline_mode<synchronous>, transform_indices = @transform_2, window_bounds = array<i64: 32, 64>}, {pipeline_mode = #tpu.pipeline_mode<synchronous>, transform_indices = @transform_3, window_bounds = array<i64: 64, 128>}, {pipeline_mode = #tpu.pipeline_mode<synchronous>, transform_indices = @transform_4, window_bounds = array<i64: 1, 128>}, {pipeline_mode = #tpu.pipeline_mode<synchronous>, transform_indices = @transform_5, window_bounds = array<i64: 5, 64, 128>}, {pipeline_mode = #tpu.pipeline_mode<synchronous>, transform_indices = @transform_6, window_bounds = array<i64: 1, 128>}, {pipeline_mode = #tpu.pipeline_mode<synchronous>, transform_indices = @transform_7, window_bounds = array<i64: 3, 128, 128>}, {pipeline_mode = #tpu.pipeline_mode<synchronous>, transform_indices = @transform_8, window_bounds = array<i64: 1, 128>}, {transform_indices = @transform_9, window_bounds = array<i64: 1, 16, 128>}]} {
    %c0 = arith.constant 0 : index
    %c0_0 = arith.constant 0 : index
    %c0_1 = arith.constant 0 : index
    %0 = vector.load %arg1[%c0, %c0_0, %c0_1] : memref<1x8x32xf32, #tpu.memory_space<vmem>>, vector<1x8x32xf32>
    %1 = vector.shape_cast %0 : vector<1x8x32xf32> to vector<8x32xf32>
    %c0_2 = arith.constant 0 : index
    %c0_3 = arith.constant 0 : index
    %2 = vector.load %arg3[%c0_2, %c0_3] : memref<32x64xf32, #tpu.memory_space<vmem>>, vector<32x64xf32>
    %cst = arith.constant dense<0.000000e+00> : vector<8x64xf32>
    %3 = tpu.matmul %1, %2, %cst {dimension_numbers = #tpu.dot_dimension_numbers<[1], [0], [0], [1], [0, 0, 1, 1], [], []>} : vector<8x32xf32>, vector<32x64xf32>, vector<8x64xf32> -> vector<8x64xf32>
    %c0_4 = arith.constant 0 : index
    %c0_5 = arith.constant 0 : index
    %4 = vector.load %arg2[%c0_4, %c0_5] : memref<22x8xf32, #tpu.memory_space<vmem>>, vector<22x8xf32>
    %cst_6 = arith.constant dense<0.000000e+00> : vector<22x64xf32>
    %5 = tpu.matmul %4, %3, %cst_6 {dimension_numbers = #tpu.dot_dimension_numbers<[1], [0], [0], [1], [0, 0, 1, 1], [], []>} : vector<22x8xf32>, vector<8x64xf32>, vector<22x64xf32> -> vector<22x64xf32>
    %6 = vector.extract_strided_slice %5 {offsets = [3, 0], sizes = [16, 64], strides = [1, 1]} : vector<22x64xf32> to vector<16x64xf32>
    %c0_7 = arith.constant 0 : index
    %c0_8 = arith.constant 0 : index
    %7 = vector.load %arg4[%c0_7, %c0_8] : memref<64x128xf32, #tpu.memory_space<vmem>>, vector<64x128xf32>
    %cst_9 = arith.constant dense<0.000000e+00> : vector<16x128xf32>
    %8 = tpu.matmul %6, %7, %cst_9 {dimension_numbers = #tpu.dot_dimension_numbers<[1], [0], [0], [1], [0, 0, 1, 1], [], []>} : vector<16x64xf32>, vector<64x128xf32>, vector<16x128xf32> -> vector<16x128xf32>
    %c0_10 = arith.constant 0 : index
    %c0_11 = arith.constant 0 : index
    %9 = vector.load %arg5[%c0_10, %c0_11] : memref<1x128xf32, #tpu.memory_space<vmem>>, vector<1x128xf32>
    %10 = vector.broadcast %9 : vector<1x128xf32> to vector<16x128xf32>
    %11 = arith.addf %8, %10 : vector<16x128xf32>
    %12 = vector.extract_strided_slice %5 {offsets = [0, 0], sizes = [18, 64], strides = [1, 1]} : vector<22x64xf32> to vector<18x64xf32>
    %c0_12 = arith.constant 0 : index
    %c0_13 = arith.constant 0 : index
    %c0_14 = arith.constant 0 : index
    %13 = vector.load %arg6[%c0_12, %c0_13, %c0_14] : memref<5x64x128xf32, #tpu.memory_space<vmem>>, vector<1x64x128xf32>
    %14 = vector.shape_cast %13 : vector<1x64x128xf32> to vector<64x128xf32>
    %cst_15 = arith.constant dense<0.000000e+00> : vector<18x128xf32>
    %15 = tpu.matmul %12, %14, %cst_15 {dimension_numbers = #tpu.dot_dimension_numbers<[1], [0], [0], [1], [0, 0, 1, 1], [], []>} : vector<18x64xf32>, vector<64x128xf32>, vector<18x128xf32> -> vector<18x128xf32>
    %16 = vector.extract_strided_slice %5 {offsets = [1, 0], sizes = [18, 64], strides = [1, 1]} : vector<22x64xf32> to vector<18x64xf32>
    %c1 = arith.constant 1 : index
    %c0_16 = arith.constant 0 : index
    %c0_17 = arith.constant 0 : index
    %17 = vector.load %arg6[%c1, %c0_16, %c0_17] : memref<5x64x128xf32, #tpu.memory_space<vmem>>, vector<1x64x128xf32>
    %18 = vector.shape_cast %17 : vector<1x64x128xf32> to vector<64x128xf32>
    %cst_18 = arith.constant dense<0.000000e+00> : vector<18x128xf32>
    %19 = tpu.matmul %16, %18, %cst_18 {dimension_numbers = #tpu.dot_dimension_numbers<[1], [0], [0], [1], [0, 0, 1, 1], [], []>} : vector<18x64xf32>, vector<64x128xf32>, vector<18x128xf32> -> vector<18x128xf32>
    %20 = arith.addf %15, %19 : vector<18x128xf32>
    %21 = vector.extract_strided_slice %5 {offsets = [2, 0], sizes = [18, 64], strides = [1, 1]} : vector<22x64xf32> to vector<18x64xf32>
    %c2 = arith.constant 2 : index
    %c0_19 = arith.constant 0 : index
    %c0_20 = arith.constant 0 : index
    %22 = vector.load %arg6[%c2, %c0_19, %c0_20] : memref<5x64x128xf32, #tpu.memory_space<vmem>>, vector<1x64x128xf32>
    %23 = vector.shape_cast %22 : vector<1x64x128xf32> to vector<64x128xf32>
    %cst_21 = arith.constant dense<0.000000e+00> : vector<18x128xf32>
    %24 = tpu.matmul %21, %23, %cst_21 {dimension_numbers = #tpu.dot_dimension_numbers<[1], [0], [0], [1], [0, 0, 1, 1], [], []>} : vector<18x64xf32>, vector<64x128xf32>, vector<18x128xf32> -> vector<18x128xf32>
    %25 = arith.addf %20, %24 : vector<18x128xf32>
    %26 = vector.extract_strided_slice %5 {offsets = [3, 0], sizes = [18, 64], strides = [1, 1]} : vector<22x64xf32> to vector<18x64xf32>
    %c3 = arith.constant 3 : index
    %c0_22 = arith.constant 0 : index
    %c0_23 = arith.constant 0 : index
    %27 = vector.load %arg6[%c3, %c0_22, %c0_23] : memref<5x64x128xf32, #tpu.memory_space<vmem>>, vector<1x64x128xf32>
    %28 = vector.shape_cast %27 : vector<1x64x128xf32> to vector<64x128xf32>
    %cst_24 = arith.constant dense<0.000000e+00> : vector<18x128xf32>
    %29 = tpu.matmul %26, %28, %cst_24 {dimension_numbers = #tpu.dot_dimension_numbers<[1], [0], [0], [1], [0, 0, 1, 1], [], []>} : vector<18x64xf32>, vector<64x128xf32>, vector<18x128xf32> -> vector<18x128xf32>
    %30 = arith.addf %25, %29 : vector<18x128xf32>
    %31 = vector.extract_strided_slice %5 {offsets = [4, 0], sizes = [18, 64], strides = [1, 1]} : vector<22x64xf32> to vector<18x64xf32>
    %c4 = arith.constant 4 : index
    %c0_25 = arith.constant 0 : index
    %c0_26 = arith.constant 0 : index
    %32 = vector.load %arg6[%c4, %c0_25, %c0_26] : memref<5x64x128xf32, #tpu.memory_space<vmem>>, vector<1x64x128xf32>
    %33 = vector.shape_cast %32 : vector<1x64x128xf32> to vector<64x128xf32>
    %cst_27 = arith.constant dense<0.000000e+00> : vector<18x128xf32>
    %34 = tpu.matmul %31, %33, %cst_27 {dimension_numbers = #tpu.dot_dimension_numbers<[1], [0], [0], [1], [0, 0, 1, 1], [], []>} : vector<18x64xf32>, vector<64x128xf32>, vector<18x128xf32> -> vector<18x128xf32>
    %35 = arith.addf %30, %34 : vector<18x128xf32>
    %c0_28 = arith.constant 0 : index
    %c0_29 = arith.constant 0 : index
    %36 = vector.load %arg7[%c0_28, %c0_29] : memref<1x128xf32, #tpu.memory_space<vmem>>, vector<1x128xf32>
    %37 = vector.broadcast %36 : vector<1x128xf32> to vector<18x128xf32>
    %38 = arith.addf %35, %37 : vector<18x128xf32>
    %cst_30 = arith.constant 0.000000e+00 : f32
    %39 = vector.broadcast %cst_30 : f32 to vector<18x128xf32>
    %40 = arith.cmpf oge, %38, %39 : vector<18x128xf32>
    %cst_31 = arith.constant 0.00999999977 : f32
    %41 = vector.broadcast %cst_31 : f32 to vector<18x128xf32>
    %42 = arith.mulf %41, %38 : vector<18x128xf32>
    %43 = arith.select %40, %38, %42 : vector<18x128xi1>, vector<18x128xf32>
    %44 = tpu.iota {dimensions = array<i32: 0>} : vector<18x128xi32>
    %c0_i32 = arith.constant 0 : i32
    %45 = vector.broadcast %c0_i32 : i32 to vector<18x128xi32>
    %46 = arith.cmpi eq, %44, %45 : vector<18x128xi32>
    %c17_i32 = arith.constant 17 : i32
    %47 = vector.broadcast %c17_i32 : i32 to vector<18x128xi32>
    %48 = arith.cmpi eq, %44, %47 : vector<18x128xi32>
    %49 = arith.ori %46, %48 : vector<18x128xi1>
    %cst_32 = arith.constant 0.000000e+00 : f32
    %50 = vector.broadcast %cst_32 : f32 to vector<18x128xf32>
    %51 = arith.select %49, %50, %43 : vector<18x128xi1>, vector<18x128xf32>
    %52 = vector.extract_strided_slice %51 {offsets = [0, 0], sizes = [16, 128], strides = [1, 1]} : vector<18x128xf32> to vector<16x128xf32>
    %c0_33 = arith.constant 0 : index
    %c0_34 = arith.constant 0 : index
    %c0_35 = arith.constant 0 : index
    %53 = vector.load %arg8[%c0_33, %c0_34, %c0_35] : memref<3x128x128xf32, #tpu.memory_space<vmem>>, vector<1x128x128xf32>
    %54 = vector.shape_cast %53 : vector<1x128x128xf32> to vector<128x128xf32>
    %cst_36 = arith.constant dense<0.000000e+00> : vector<16x128xf32>
    %55 = tpu.matmul %52, %54, %cst_36 {dimension_numbers = #tpu.dot_dimension_numbers<[1], [0], [0], [1], [0, 0, 1, 1], [], []>} : vector<16x128xf32>, vector<128x128xf32>, vector<16x128xf32> -> vector<16x128xf32>
    %56 = vector.extract_strided_slice %51 {offsets = [1, 0], sizes = [16, 128], strides = [1, 1]} : vector<18x128xf32> to vector<16x128xf32>
    %c1_37 = arith.constant 1 : index
    %c0_38 = arith.constant 0 : index
    %c0_39 = arith.constant 0 : index
    %57 = vector.load %arg8[%c1_37, %c0_38, %c0_39] : memref<3x128x128xf32, #tpu.memory_space<vmem>>, vector<1x128x128xf32>
    %58 = vector.shape_cast %57 : vector<1x128x128xf32> to vector<128x128xf32>
    %cst_40 = arith.constant dense<0.000000e+00> : vector<16x128xf32>
    %59 = tpu.matmul %56, %58, %cst_40 {dimension_numbers = #tpu.dot_dimension_numbers<[1], [0], [0], [1], [0, 0, 1, 1], [], []>} : vector<16x128xf32>, vector<128x128xf32>, vector<16x128xf32> -> vector<16x128xf32>
    %60 = arith.addf %55, %59 : vector<16x128xf32>
    %61 = vector.extract_strided_slice %51 {offsets = [2, 0], sizes = [16, 128], strides = [1, 1]} : vector<18x128xf32> to vector<16x128xf32>
    %c2_41 = arith.constant 2 : index
    %c0_42 = arith.constant 0 : index
    %c0_43 = arith.constant 0 : index
    %62 = vector.load %arg8[%c2_41, %c0_42, %c0_43] : memref<3x128x128xf32, #tpu.memory_space<vmem>>, vector<1x128x128xf32>
    %63 = vector.shape_cast %62 : vector<1x128x128xf32> to vector<128x128xf32>
    %cst_44 = arith.constant dense<0.000000e+00> : vector<16x128xf32>
    %64 = tpu.matmul %61, %63, %cst_44 {dimension_numbers = #tpu.dot_dimension_numbers<[1], [0], [0], [1], [0, 0, 1, 1], [], []>} : vector<16x128xf32>, vector<128x128xf32>, vector<16x128xf32> -> vector<16x128xf32>
    %65 = arith.addf %60, %64 : vector<16x128xf32>
    %c0_45 = arith.constant 0 : index
    %c0_46 = arith.constant 0 : index
    %66 = vector.load %arg9[%c0_45, %c0_46] : memref<1x128xf32, #tpu.memory_space<vmem>>, vector<1x128xf32>
    %67 = vector.broadcast %66 : vector<1x128xf32> to vector<16x128xf32>
    %68 = arith.addf %65, %67 : vector<16x128xf32>
    %69 = arith.addf %68, %11 : vector<16x128xf32>
    %c0_47 = arith.constant 0 : index
    %c0_48 = arith.constant 0 : index
    %c0_49 = arith.constant 0 : index
    %70 = vector.load %arg10[%c0_47, %c0_48, %c0_49] : memref<1x16x128xf32, #tpu.memory_space<vmem>>, vector<1x16x128xf32>
    %71 = vector.shape_cast %70 : vector<1x16x128xf32> to vector<16x128xf32>
    %72 = vector.shape_cast %69 : vector<16x128xf32> to vector<1x16x128xf32>
    tpu.vector_store %arg10[%c0_47, %c0_48, %c0_49], %72 {strides = array<i32>} : memref<1x16x128xf32, #tpu.memory_space<vmem>>, vector<1x16x128xf32>,
    return
  }
  func.func @transform_0(%arg0: i32) -> (i32, i32, i32) {
    %c0_i32 = arith.constant 0 : i32
    %c0_i32_0 = arith.constant 0 : i32
    %c0_i32_1 = arith.constant 0 : i32
    return %arg0, %c0_i32, %c0_i32_0 : i32, i32, i32
  }
  func.func @transform_1(%arg0: i32) -> (i32, i32) {
    %c0_i32 = arith.constant 0 : i32
    %c0_i32_0 = arith.constant 0 : i32
    %c0_i32_1 = arith.constant 0 : i32
    return %c0_i32, %c0_i32_0 : i32, i32
  }
  func.func @transform_2(%arg0: i32) -> (i32, i32) {
    %c0_i32 = arith.constant 0 : i32
    %c0_i32_0 = arith.constant 0 : i32
    %c0_i32_1 = arith.constant 0 : i32
    return %c0_i32, %c0_i32_0 : i32, i32
  }
  func.func @transform_3(%arg0: i32) -> (i32, i32) {
    %c0_i32 = arith.constant 0 : i32
    %c0_i32_0 = arith.constant 0 : i32
    %c0_i32_1 = arith.constant 0 : i32
    return %c0_i32, %c0_i32_0 : i32, i32
  }
  func.func @transform_4(%arg0: i32) -> (i32, i32) {
    %c0_i32 = arith.constant 0 : i32
    %c0_i32_0 = arith.constant 0 : i32
    %c0_i32_1 = arith.constant 0 : i32
    return %c0_i32, %c0_i32_0 : i32, i32
  }
  func.func @transform_5(%arg0: i32) -> (i32, i32, i32) {
    %c0_i32 = arith.constant 0 : i32
    %c0_i32_0 = arith.constant 0 : i32
    %c0_i32_1 = arith.constant 0 : i32
    %c0_i32_2 = arith.constant 0 : i32
    return %c0_i32, %c0_i32_0, %c0_i32_1 : i32, i32, i32
  }
  func.func @transform_6(%arg0: i32) -> (i32, i32) {
    %c0_i32 = arith.constant 0 : i32
    %c0_i32_0 = arith.constant 0 : i32
    %c0_i32_1 = arith.constant 0 : i32
    return %c0_i32, %c0_i32_0 : i32, i32
  }
  func.func @transform_7(%arg0: i32) -> (i32, i32, i32) {
    %c0_i32 = arith.constant 0 : i32
    %c0_i32_0 = arith.constant 0 : i32
    %c0_i32_1 = arith.constant 0 : i32
    %c0_i32_2 = arith.constant 0 : i32
    return %c0_i32, %c0_i32_0, %c0_i32_1 : i32, i32, i32
  }
  func.func @transform_8(%arg0: i32) -> (i32, i32) {
    %c0_i32 = arith.constant 0 : i32
    %c0_i32_0 = arith.constant 0 : i32
    %c0_i32_1 = arith.constant 0 : i32
    return %c0_i32, %c0_i32_0 : i32, i32
  }
  func.func @transform_9(%arg0: i32) -> (i32, i32, i32) {
    %c0_i32 = arith.constant 0 : i32
    %c0_i32_0 = arith.constant 0 : i32
    %c0_i32_1 = arith.constant 0 : i32
    return %arg0, %c0_i32, %c0_i32_0 : i32, i32, i32
  }
}

</mosaic_0001>

<llo_original>
// kernel: upconv_block.1
$region0: #{upconv_block.1}
  #allocation0 [shape = 'u32[]', space=smem, size = 0x4, offset = 0x4, fixed_abs, tag = 'smem constant byte address 0x4 - core index']
  #allocation1 [shape = 'u32[144,128]{1,0:T(1,128)}', space=vmem, size = 0x12000, scoped, tag = 'internal scratch']
  %s0 = inlined_call_operand.vmem [shape: f32[2,8,32], index: 0, kind: input, shape index: {}]
  %s1 = inlined_call_operand.vmem [shape: f32[22,8], index: 1, kind: input, shape index: {}]
  %s2 = inlined_call_operand.vmem [shape: f32[32,64], index: 2, kind: input, shape index: {}]
  %s3 = inlined_call_operand.vmem [shape: f32[64,128], index: 3, kind: input, shape index: {}]
  %s4 = inlined_call_operand.vmem [shape: f32[1,128], index: 4, kind: input, shape index: {}]
  %s5 = inlined_call_operand.vmem [shape: f32[5,64,128], index: 5, kind: input, shape index: {}]
  %s6 = inlined_call_operand.vmem [shape: f32[1,128], index: 6, kind: input, shape index: {}]
  %s7 = inlined_call_operand.vmem [shape: f32[3,128,128], index: 7, kind: input, shape index: {}]
  %s8 = inlined_call_operand.vmem [shape: f32[1,128], index: 8, kind: input, shape index: {}]
  %s9 = inlined_call_operand.vmem [shape: f32[2,16,128], index: 9, kind: output, shape index: {}]
  %s10 = sld [smem:[#allocation0]]
  $region69: #{upconv_block.1} parent=0
    _
  %s12 = ssub.s32 1, %s10
  %s13 = scalar_select 0, %s12, %s10
  loop: start=0, step=1, limit=4
  $region2: #{upconv_block.1} parent=0 // loop_pre_header
    _
  $region3: #{upconv_block.1} parent=0 // loop_header
    %s15 = sphi 0, %s19
    %p16 = scmp.ge.s32.totalorder %s15, 4
    %s25 = sphi 0, %s27
    %s28 = sphi 0, %s25
    %s29 = sphi 0, %s28
    %s45 = sphi 0, %s29
    %s49 = sphi 0, %s49
    %s51 = sphi 0, %s49
    %s52 = sphi 0, %s51
    %s66 = sphi 0, %s52
    %s70 = sphi 0, %s70
    %s72 = sphi 0, %s70
    %s73 = sphi 0, %s72
    %s87 = sphi 0, %s73
    %s91 = sphi 0, %s91
    %s93 = sphi 0, %s91
    %s94 = sphi 0, %s93
    %s108 = sphi 0, %s94
    %s112 = sphi 0, %s112
    %s114 = sphi 0, %s112
    %s115 = sphi 0, %s114
    %s129 = sphi 0, %s115
    %s133 = sphi 0, %s133
    %s135 = sphi 0, %s133
    %s136 = sphi 0, %s135
    %s150 = sphi 0, %s136
    %s154 = sphi 0, %s154
    %s156 = sphi 0, %s154
    %s157 = sphi 0, %s156
    %s171 = sphi 0, %s157
    %s175 = sphi 0, %s175
    %s177 = sphi 0, %s175
    %s178 = sphi 0, %s177
    %s192 = sphi 0, %s178
    %s196 = sphi 0, %s196
    %s198 = sphi 0, %s196
    %s199 = sphi 0, %s198
    %s213 = sphi 0, %s199
    %s219 = sphi 0, %s221
    %s222 = sphi 0, %s219
    %s223 = sphi 0, %s222
    %s239 = sphi 0, %s223
  $region4: #{upconv_block.1} parent=0 // loop_header_branch
    %18 = sbr.rel (%p16) target = $region8
  $region5: #{upconv_block.1} parent=0 // loop_body
    %s20 = ssub.s32 %s15, 1
    %s21 = ssub.s32 %s15, 2
    %s22 = sadd.s32 %s15, 1
    %s23 = ssub.s32 %s15, %s22
    %p24 = scmp.eq.s32.totalorder %s23, 0
    %s26 = sadd.s32 %s25, 1
    %s27 = scalar_select %p24, %s25, %s26
    %p30 = pneg %p24
    %p31 = scmp.eq.s32.totalorder %s15, 1
    %p32 = por %p30, %p31
    %p33 = scmp.ne.s32.totalorder %s25, %s28
    %p34 = scmp.eq.s32.totalorder %s15, 0
    %p35 = por %p33, %p34
    %p36 = scmp.ne.s32.totalorder %s25, %s28
    %p37 = scmp.eq.s32.totalorder %s20, 1
    %p38 = por %p36, %p37
    %p39 = scmp.ne.s32.totalorder %s28, %s29
    %p40 = scmp.eq.s32.totalorder %s20, 0
    %p41 = por %p39, %p40
    %p42 = scmp.ne.s32.totalorder %s28, %s29
    %p43 = scmp.eq.s32.totalorder %s21, 1
    %p44 = por %p42, %p43
    %p46 = scmp.ne.s32.totalorder %s29, %s45
    %p47 = scmp.eq.s32.totalorder %s21, 0
    %p48 = por %p46, %p47
    %s50 = sadd.s32 %s49, 1
    %p53 = scmp.eq.s32.totalorder %s15, 1
    %p54 = scmp.ne.s32.totalorder %s49, %s51
    %p55 = scmp.eq.s32.totalorder %s15, 0
    %p56 = por %p54, %p55
    %p57 = scmp.ne.s32.totalorder %s49, %s51
    %p58 = scmp.eq.s32.totalorder %s20, 1
    %p59 = por %p57, %p58
    %p60 = scmp.ne.s32.totalorder %s51, %s52
    %p61 = scmp.eq.s32.totalorder %s20, 0
    %p62 = por %p60, %p61
    %p63 = scmp.ne.s32.totalorder %s51, %s52
    %p64 = scmp.eq.s32.totalorder %s21, 1
    %p65 = por %p63, %p64
    %p67 = scmp.ne.s32.totalorder %s52, %s66
    %p68 = scmp.eq.s32.totalorder %s21, 0
    %p69 = por %p67, %p68
    %s71 = sadd.s32 %s70, 1
    %p74 = scmp.eq.s32.totalorder %s15, 1
    %p75 = scmp.ne.s32.totalorder %s70, %s72
    %p76 = scmp.eq.s32.totalorder %s15, 0
    %p77 = por %p75, %p76
    %p78 = scmp.ne.s32.totalorder %s70, %s72
    %p79 = scmp.eq.s32.totalorder %s20, 1
    %p80 = por %p78, %p79
    %p81 = scmp.ne.s32.totalorder %s72, %s73
    %p82 = scmp.eq.s32.totalorder %s20, 0
    %p83 = por %p81, %p82
    %p84 = scmp.ne.s32.totalorder %s72, %s73
    %p85 = scmp.eq.s32.totalorder %s21, 1
    %p86 = por %p84, %p85
    %p88 = scmp.ne.s32.totalorder %s73, %s87
    %p89 = scmp.eq.s32.totalorder %s21, 0
    %p90 = por %p88, %p89
    %s92 = sadd.s32 %s91, 1
    %p95 = scmp.eq.s32.totalorder %s15, 1
    %p96 = scmp.ne.s32.totalorder %s91, %s93
    %p97 = scmp.eq.s32.totalorder %s15, 0
    %p98 = por %p96, %p97
    %p99 = scmp.ne.s32.totalorder %s91, %s93
    %p100 = scmp.eq.s32.totalorder %s20, 1
    %p101 = por %p99, %p100
    %p102 = scmp.ne.s32.totalorder %s93, %s94
    %p103 = scmp.eq.s32.totalorder %s20, 0
    %p104 = por %p102, %p103
    %p105 = scmp.ne.s32.totalorder %s93, %s94
    %p106 = scmp.eq.s32.totalorder %s21, 1
    %p107 = por %p105, %p106
    %p109 = scmp.ne.s32.totalorder %s94, %s108
    %p110 = scmp.eq.s32.totalorder %s21, 0
    %p111 = por %p109, %p110
    %s113 = sadd.s32 %s112, 1
    %p116 = scmp.eq.s32.totalorder %s15, 1
    %p117 = scmp.ne.s32.totalorder %s112, %s114
    %p118 = scmp.eq.s32.totalorder %s15, 0
    %p119 = por %p117, %p118
    %p120 = scmp.ne.s32.totalorder %s112, %s114
    %p121 = scmp.eq.s32.totalorder %s20, 1
    %p122 = por %p120, %p121
    %p123 = scmp.ne.s32.totalorder %s114, %s115
    %p124 = scmp.eq.s32.totalorder %s20, 0
    %p125 = por %p123, %p124
    %p126 = scmp.ne.s32.totalorder %s114, %s115
    %p127 = scmp.eq.s32.totalorder %s21, 1
    %p128 = por %p126, %p127
    %p130 = scmp.ne.s32.totalorder %s115, %s129
    %p131 = scmp.eq.s32.totalorder %s21, 0
    %p132 = por %p130, %p131
    %s134 = sadd.s32 %s133, 1
    %p137 = scmp.eq.s32.totalorder %s15, 1
    %p138 = scmp.ne.s32.totalorder %s133, %s135
    %p139 = scmp.eq.s32.totalorder %s15, 0
    %p140 = por %p138, %p139
    %p141 = scmp.ne.s32.totalorder %s133, %s135
    %p142 = scmp.eq.s32.totalorder %s20, 1
    %p143 = por %p141, %p142
    %p144 = scmp.ne.s32.totalorder %s135, %s136
    %p145 = scmp.eq.s32.totalorder %s20, 0
    %p146 = por %p144, %p145
    %p147 = scmp.ne.s32.totalorder %s135, %s136
    %p148 = scmp.eq.s32.totalorder %s21, 1
    %p149 = por %p147, %p148
    %p151 = scmp.ne.s32.totalorder %s136, %s150
    %p152 = scmp.eq.s32.totalorder %s21, 0
    %p153 = por %p151, %p152
    %s155 = sadd.s32 %s154, 1
    %p158 = scmp.eq.s32.totalorder %s15, 1
    %p159 = scmp.ne.s32.totalorder %s154, %s156
    %p160 = scmp.eq.s32.totalorder %s15, 0
    %p161 = por %p159, %p160
    %p162 = scmp.ne.s32.totalorder %s154, %s156
    %p163 = scmp.eq.s32.totalorder %s20, 1
    %p164 = por %p162, %p163
    %p165 = scmp.ne.s32.totalorder %s156, %s157
    %p166 = scmp.eq.s32.totalorder %s20, 0
    %p167 = por %p165, %p166
    %p168 = scmp.ne.s32.totalorder %s156, %s157
    %p169 = scmp.eq.s32.totalorder %s21, 1
    %p170 = por %p168, %p169
    %p172 = scmp.ne.s32.totalorder %s157, %s171
    %p173 = scmp.eq.s32.totalorder %s21, 0
    %p174 = por %p172, %p173
    %s176 = sadd.s32 %s175, 1
    %p179 = scmp.eq.s32.totalorder %s15, 1
    %p180 = scmp.ne.s32.totalorder %s175, %s177
    %p181 = scmp.eq.s32.totalorder %s15, 0
    %p182 = por %p180, %p181
    %p183 = scmp.ne.s32.totalorder %s175, %s177
    %p184 = scmp.eq.s32.totalorder %s20, 1
    %p185 = por %p183, %p184
    %p186 = scmp.ne.s32.totalorder %s177, %s178
    %p187 = scmp.eq.s32.totalorder %s20, 0
    %p188 = por %p186, %p187
    %p189 = scmp.ne.s32.totalorder %s177, %s178
    %p190 = scmp.eq.s32.totalorder %s21, 1
    %p191 = por %p189, %p190
    %p193 = scmp.ne.s32.totalorder %s178, %s192
    %p194 = scmp.eq.s32.totalorder %s21, 0
    %p195 = por %p193, %p194
    %s197 = sadd.s32 %s196, 1
    %p200 = scmp.eq.s32.totalorder %s15, 1
    %p201 = scmp.ne.s32.totalorder %s196, %s198
    %p202 = scmp.eq.s32.totalorder %s15, 0
    %p203 = por %p201, %p202
    %p204 = scmp.ne.s32.totalorder %s196, %s198
    %p205 = scmp.eq.s32.totalorder %s20, 1
    %p206 = por %p204, %p205
    %p207 = scmp.ne.s32.totalorder %s198, %s199
    %p208 = scmp.eq.s32.totalorder %s20, 0
    %p209 = por %p207, %p208
    %p210 = scmp.ne.s32.totalorder %s198, %s199
    %p211 = scmp.eq.s32.totalorder %s21, 1
    %p212 = por %p210, %p211
    %p214 = scmp.ne.s32.totalorder %s199, %s213
    %p215 = scmp.eq.s32.totalorder %s21, 0
    %p216 = por %p214, %p215
    %s217 = ssub.s32 %s15, %s22
    %p218 = scmp.eq.s32.totalorder %s217, 0
    %s220 = sadd.s32 %s219, 1
    %s221 = scalar_select %p218, %s219, %s220
    %p224 = pneg %p218
    %p225 = scmp.eq.s32.totalorder %s15, 1
    %p226 = por %p224, %p225
    %p227 = scmp.ne.s32.totalorder %s219, %s222
    %p228 = scmp.eq.s32.totalorder %s15, 0
    %p229 = por %p227, %p228
    %p230 = scmp.ne.s32.totalorder %s219, %s222
    %p231 = scmp.eq.s32.totalorder %s20, 1
    %p232 = por %p230, %p231
    %p233 = scmp.ne.s32.totalorder %s222, %s223
    %p234 = scmp.eq.s32.totalorder %s20, 0
    %p235 = por %p233, %p234
    %p236 = scmp.ne.s32.totalorder %s222, %s223
    %p237 = scmp.eq.s32.totalorder %s21, 1
    %p238 = por %p236, %p237
    %p240 = scmp.ne.s32.totalorder %s223, %s239
    %p241 = scmp.eq.s32.totalorder %s21, 0
    %p242 = por %p240, %p241
    %p243 = scmp.le.s32.totalorder 1, %s15
    %p244 = scmp.lt.s32.totalorder %s15, 3
    %p245 = pnand %p243, %p244
    %p246 = pneg %p245
    // Predicated region
    $region9: #{upconv_block.1} parent=5 // pred_check
      _
    $region10: #{upconv_block.1} parent=5 // pred_check_branch
      %248 = sbr.rel (%p245) target = $region12
    $region11: #{upconv_block.1} parent=5 // pred_region
      %s249 = ssub.s32 %s15, 1
      // Predicated region
      $region13: #{upconv_block.1} parent=11 // pred_check
        %p250 = pneg %p62
      $region14: #{upconv_block.1} parent=11 // pred_check_branch
        %252 = sbr.rel (%p250) target = $region16
      $region15: #{upconv_block.1} parent=11 // pred_region
        _
      $region16: #{upconv_block.1} parent=11 // pred_fallthru
        _
      // Predicated region
      $region17: #{upconv_block.1} parent=11 // pred_check
        %p253 = pneg %p83
      $region18: #{upconv_block.1} parent=11 // pred_check_branch
        %255 = sbr.rel (%p253) target = $region20
      $region19: #{upconv_block.1} parent=11 // pred_region
        _
      $region20: #{upconv_block.1} parent=11 // pred_fallthru
        _
      // Predicated region
      $region21: #{upconv_block.1} parent=11 // pred_check
        %p256 = pneg %p104
      $region22: #{upconv_block.1} parent=11 // pred_check_branch
        %258 = sbr.rel (%p256) target = $region24
      $region23: #{upconv_block.1} parent=11 // pred_region
        _
      $region24: #{upconv_block.1} parent=11 // pred_fallthru
        _
      // Predicated region
      $region25: #{upconv_block.1} parent=11 // pred_check
        %p259 = pneg %p125
      $region26: #{upconv_block.1} parent=11 // pred_check_branch
        %261 = sbr.rel (%p259) target = $region28
      $region27: #{upconv_block.1} parent=11 // pred_region
        _
      $region28: #{upconv_block.1} parent=11 // pred_fallthru
        _
      // Predicated region
      $region29: #{upconv_block.1} parent=11 // pred_check
        %p262 = pneg %p146
      $region30: #{upconv_block.1} parent=11 // pred_check_branch
        %264 = sbr.rel (%p262) target = $region32
      $region31: #{upconv_block.1} parent=11 // pred_region
        _
      $region32: #{upconv_block.1} parent=11 // pred_fallthru
        _
      // Predicated region
      $region33: #{upconv_block.1} parent=11 // pred_check
        %p265 = pneg %p167
      $region34: #{upconv_block.1} parent=11 // pred_check_branch
        %267 = sbr.rel (%p265) target = $region36
      $region35: #{upconv_block.1} parent=11 // pred_region
        _
      $region36: #{upconv_block.1} parent=11 // pred_fallthru
        _
      // Predicated region
      $region37: #{upconv_block.1} parent=11 // pred_check
        %p268 = pneg %p188
      $region38: #{upconv_block.1} parent=11 // pred_check_branch
        %270 = sbr.rel (%p268) target = $region40
      $region39: #{upconv_block.1} parent=11 // pred_region
        _
      $region40: #{upconv_block.1} parent=11 // pred_fallthru
        _
      // Predicated region
      $region41: #{upconv_block.1} parent=11 // pred_check
        %p271 = pneg %p209
      $region42: #{upconv_block.1} parent=11 // pred_check_branch
        %273 = sbr.rel (%p271) target = $region44
      $region43: #{upconv_block.1} parent=11 // pred_region
        _
      $region44: #{upconv_block.1} parent=11 // pred_fallthru
        _
    $region12: #{upconv_block.1} parent=5 // pred_fallthru
      _
    %p274 = scmp.lt.s32.totalorder %s15, 2
    // Predicated region
    $region45: #{upconv_block.1} parent=5 // pred_check
      %p275 = pneg %p274
    $region46: #{upconv_block.1} parent=5 // pred_check_branch
      %277 = sbr.rel (%p275) target = $region48
    $region47: #{upconv_block.1} parent=5 // pred_region
      // Predicated region
      $region49: #{upconv_block.1} parent=47 // pred_check
        %p278 = pneg %p35
      $region50: #{upconv_block.1} parent=47 // pred_check_branch
        %280 = sbr.rel (%p278) target = $region52
      $region51: #{upconv_block.1} parent=47 // pred_region
        %p281 = scmp.lt.s32.totalorder %s15, 1
        %s282 = scalar_select %p281, %s15, 1
        %s283 = smul.addr %s282, 8
        %s284 = scalar_lea.vmem %s0, %s283
      $region52: #{upconv_block.1} parent=47 // pred_fallthru
        _
    $region48: #{upconv_block.1} parent=5 // pred_fallthru
      _
    %p285 = scmp.le.s32.totalorder 1, %s15
    %p286 = scmp.lt.s32.totalorder %s15, 3
    %p287 = pnand %p285, %p286
    %p288 = pneg %p287
    // Predicated region
    $region53: #{upconv_block.1} parent=5 // pred_check
      _
    $region54: #{upconv_block.1} parent=5 // pred_check_branch
      %290 = sbr.rel (%p287) target = $region56
    $region55: #{upconv_block.1} parent=5 // pred_region
      %s291 = ssub.s32 %s15, 1
      %p292 = scmp.lt.s32.totalorder %s20, 1
      %s293 = scalar_select %p292, %s20, 1
      %s294 = smul.addr %s293, 8
      %s295 = scalar_lea.vmem %s0, %s294
      %p296 = pneg %p41
      %p297 = pneg %p38
      %p298 = pneg %p62
      %p299 = pneg %p59
      %p300 = pneg %p83
      %p301 = pneg %p80
      %p302 = pneg %p104
      %p303 = pneg %p101
      %p304 = pneg %p125
      %p305 = pneg %p122
      %p306 = pneg %p146
      %p307 = pneg %p143
      %p308 = pneg %p167
      %p309 = pneg %p164
      %p310 = pneg %p188
      %p311 = pneg %p185
      %p312 = pneg %p209
      %p313 = pneg %p206
      %p314 = pneg %p235
      %p315 = pneg %p232
      %p316 = scmp.lt.s32.totalorder %s20, 1
      %s317 = scalar_select %p316, %s20, 1
      %s318 = smul.addr %s317, 2
      %s319 = smul.addr %s318, 8
      %s320 = scalar_lea.vmem %s9, %s319
      %p321 = scmp.lt.s32.totalorder %s20, 1
      %s322 = scalar_select %p321, %s20, 1
      %s323 = smul.addr %s322, 8
      %s324 = scalar_lea.vmem %s0, %s323
      %p325 = scmp.lt.s32.totalorder %s20, 1
      %s326 = scalar_select %p325, %s20, 1
      %s327 = smul.addr %s326, 2
      %s328 = smul.addr %s327, 8
      %s329 = scalar_lea.vmem %s9, %s328
      %v330 = vld [vmem:[%s324] sm:$0xff]
      %v331 = vld [vmem:[%s2] sm:$0xff]
      %v332 = vld [vmem:[%s2 + $0x8] sm:$0xff]
      %v333 = vld [vmem:[%s2 + $0x10] sm:$0xff]
      %v334 = vld [vmem:[%s2 + $0x18] sm:$0xff]
      %vm335 = vcmask 261120
      %v337 = vsel %vm335, %v330, 0
      %339 = vmatprep.subr.mxu0 0.0
      %340 = vmatpush1.msra.mxu0 %v331
      %341 = vmatprep.subr.mxu0 0.0
      %342 = vmatpush1.msra.mxu0 %v332
      %343 = vmatprep.subr.mxu0 0.0
      %344 = vmatpush1.msra.mxu0 %v333
      %345 = vmatprep.subr.mxu0 0.0
      %346 = vmatpush1.msra.mxu0 %v334
      %347 = vmatprep.subr.mxu0 0.0
      %348 = vmatpush1.msra.mxu0 0.0
      %349 = vmatprep.subr.mxu0 0.0
      %350 = vmatpush1.msra.mxu0 0.0
      %351 = vmatprep.subr.mxu0 0.0
      %352 = vmatpush1.msra.mxu0 0.0
      %353 = vmatprep.subr.mxu0 0.0
      %354 = vmatpush1.msra.mxu0 0.0
      %355 = vmatprep.subr.mxu0 0.0
      %356 = vmatpush1.msra.mxu0 0.0
      %357 = vmatprep.subr.mxu0 0.0
      %358 = vmatpush1.msra.mxu0 0.0
      %359 = vmatprep.subr.mxu0 0.0
      %360 = vmatpush1.msra.mxu0 0.0
      %361 = vmatprep.subr.mxu0 0.0
      %362 = vmatpush1.msra.mxu0 0.0
      %363 = vmatprep.subr.mxu0 0.0
      %364 = vmatpush1.msra.mxu0 0.0
      %365 = vmatprep.subr.mxu0 0.0
      %366 = vmatpush1.msra.mxu0 0.0
      %367 = vmatprep.subr.mxu0 0.0
      %368 = vmatpush1.msra.mxu0 0.0
      %369 = vmatprep.subr.mxu0 0.0
      %370 = vmatpush1.msra.mxu0 0.0
      %371 = vmatprep.subr.mxu0 0.0
      %372 = vmatpush1.msra.mxu0 0.0
      %373 = vmatprep.subr.mxu0 0.0
      %374 = vmatpush1.msra.mxu0 0.0
      %375 = vmatprep.subr.mxu0 0.0
      %376 = vmatpush1.msra.mxu0 0.0
      %377 = vmatprep.subr.mxu0 0.0
      %378 = vmatpush1.msra.mxu0 0.0
      %379 = vmatprep.subr.mxu0 0.0
      %380 = vmatpush1.msra.mxu0 0.0
      %381 = vmatprep.subr.mxu0 0.0
      %382 = vmatpush1.msra.mxu0 0.0
      %383 = vmatprep.subr.mxu0 0.0
      %384 = vmatpush1.msra.mxu0 0.0
      %385 = vmatprep.subr.mxu0 0.0
      %386 = vmatpush1.msra.mxu0 0.0
      %387 = vmatprep.subr.mxu0 0.0
      %388 = vmatpush1.msra.mxu0 0.0
      %389 = vmatprep.subr.mxu0 0.0
      %390 = vmatpush1.msra.mxu0 0.0
      %391 = vmatprep.subr.mxu0 0.0
      %392 = vmatpush1.msra.mxu0 0.0
      %393 = vmatprep.subr.mxu0 0.0
      %394 = vmatpush1.msra.mxu0 0.0
      %395 = vmatprep.subr.mxu0 0.0
      %396 = vmatpush1.msra.mxu0 0.0
      %397 = vmatprep.subr.mxu0 0.0
      %398 = vmatpush1.msra.mxu0 0.0
      %399 = vmatprep.subr.mxu0 0.0
      %400 = vmatpush1.msra.mxu0 0.0
      %401 = vmatprep.subr.mxu0 0.0
      %402 = vmatpush1.msra.mxu0 0.0
      %403 = vmatprep.mubr.f32.mxu0 0.0
      %404 = vmatmul.mubr.f32.gmra.mrb[0].mxu0 %v337
      %v405 = vpop.f32.mrb[0].mxu0
      %v406 = vadd.f32 0.0, %v405
      %v407 = vpop.f32.mrb[0].mxu0
      %408 = vdwg.mxu0
      %v409 = vld [vmem:[%s1] sm:$0xff]
      %v410 = vld [vmem:[%s1 + $0x8] sm:$0xff]
      %v411 = vld [vmem:[%s1 + $0x10] sm:$0x3f]
      %vm412 = vcmask 64512
      %v414 = vsel %vm412, %v409, 0
      %v417 = vsel %vm412, %v410, 0
      %v420 = vsel %vm412, %v411, 0
      %422 = vmatprep.subr.mxu0 0.0
      %423 = vmatpush1.msra.mxu0 %v406
      %424 = vmatprep.subr.mxu0 0.0
      %425 = vmatpush1.msra.mxu0 0.0
      %426 = vmatprep.subr.mxu0 0.0
      %427 = vmatpush1.msra.mxu0 0.0
      %428 = vmatprep.subr.mxu0 0.0
      %429 = vmatpush1.msra.mxu0 0.0
      %430 = vmatprep.subr.mxu0 0.0
      %431 = vmatpush1.msra.mxu0 0.0
      %432 = vmatprep.subr.mxu0 0.0
      %433 = vmatpush1.msra.mxu0 0.0
      %434 = vmatprep.subr.mxu0 0.0
      %435 = vmatpush1.msra.mxu0 0.0
      %436 = vmatprep.subr.mxu0 0.0
      %437 = vmatpush1.msra.mxu0 0.0
      %438 = vmatprep.subr.mxu0 0.0
      %439 = vmatpush1.msra.mxu0 0.0
      %440 = vmatprep.subr.mxu0 0.0
      %441 = vmatpush1.msra.mxu0 0.0
      %442 = vmatprep.subr.mxu0 0.0
      %443 = vmatpush1.msra.mxu0 0.0
      %444 = vmatprep.subr.mxu0 0.0
      %445 = vmatpush1.msra.mxu0 0.0
      %446 = vmatprep.subr.mxu0 0.0
      %447 = vmatpush1.msra.mxu0 0.0
      %448 = vmatprep.subr.mxu0 0.0
      %449 = vmatpush1.msra.mxu0 0.0
      %450 = vmatprep.subr.mxu0 0.0
      %451 = vmatpush1.msra.mxu0 0.0
      %452 = vmatprep.subr.mxu0 0.0
      %453 = vmatpush1.msra.mxu0 0.0
      %454 = vmatprep.subr.mxu0 0.0
      %455 = vmatpush1.msra.mxu0 0.0
      %456 = vmatprep.subr.mxu0 0.0
      %457 = vmatpush1.msra.mxu0 0.0
      %458 = vmatprep.subr.mxu0 0.0
      %459 = vmatpush1.msra.mxu0 0.0
      %460 = vmatprep.subr.mxu0 0.0
      %461 = vmatpush1.msra.mxu0 0.0
      %462 = vmatprep.subr.mxu0 0.0
      %463 = vmatpush1.msra.mxu0 0.0
      %464 = vmatprep.subr.mxu0 0.0
      %465 = vmatpush1.msra.mxu0 0.0
      %466 = vmatprep.subr.mxu0 0.0
      %467 = vmatpush1.msra.mxu0 0.0
      %468 = vmatprep.subr.mxu0 0.0
      %469 = vmatpush1.msra.mxu0 0.0
      %470 = vmatprep.subr.mxu0 0.0
      %471 = vmatpush1.msra.mxu0 0.0
      %472 = vmatprep.subr.mxu0 0.0
      %473 = vmatpush1.msra.mxu0 0.0
      %474 = vmatprep.subr.mxu0 0.0
      %475 = vmatpush1.msra.mxu0 0.0
      %476 = vmatprep.subr.mxu0 0.0
      %477 = vmatpush1.msra.mxu0 0.0
      %478 = vmatprep.subr.mxu0 0.0
      %479 = vmatpush1.msra.mxu0 0.0
      %480 = vmatprep.subr.mxu0 0.0
      %481 = vmatpush1.msra.mxu0 0.0
      %482 = vmatprep.subr.mxu0 0.0
      %483 = vmatpush1.msra.mxu0 0.0
      %484 = vmatprep.subr.mxu0 0.0
      %485 = vmatpush1.msra.mxu0 0.0
      %486 = vmatprep.mubr.f32.mxu0 0.0
      %487 = vmatmul.mubr.f32.gmra.mrb[0].mxu0 %v414
      %v488 = vpop.f32.mrb[0].mxu0
      %v489 = vadd.f32 0.0, %v488
      %v490 = vpop.f32.mrb[0].mxu0
      %491 = vmatprep.mubr.f32.mxu0 0.0
      %492 = vmatmul.mubr.f32.gmra.mrb[0].mxu0 %v417
      %v493 = vpop.f32.mrb[0].mxu0
      %v494 = vadd.f32 0.0, %v493
      %v495 = vpop.f32.mrb[0].mxu0
      %496 = vmatprep.mubr.f32.mxu0 0.0
      %497 = vmatmul.mubr.f32.gmra.mrb[0].mxu0 %v420
      %v498 = vpop.f32.mrb[0].mxu0
      %v499 = vadd.f32 0.0, %v498
      %v500 = vpop.f32.mrb[0].mxu0
      %501 = vdwg.mxu0
      %v502 = vld [vmem:[%s3] sm:$0xff]
      %v503 = vld [vmem:[%s3 + $0x8] sm:$0xff]
      %v504 = vld [vmem:[%s3 + $0x10] sm:$0xff]
      %v505 = vld [vmem:[%s3 + $0x18] sm:$0xff]
      %v506 = vld [vmem:[%s3 + $0x20] sm:$0xff]
      %v507 = vld [vmem:[%s3 + $0x28] sm:$0xff]
      %v508 = vld [vmem:[%s3 + $0x30] sm:$0xff]
      %v509 = vld [vmem:[%s3 + $0x38] sm:$0xff]
      %v510 = vld [vmem:[%s4] sm:$0x1]
      %v512 = vlaneseq
      %v513 = vshrl.u32 %v512, 7
      %v514 = vsub.s32 0, %v513
      %v515 = vrot.slane %v510, %v514
      %vm520 = vcmask 1044480
      %v521 = vrot.slane %v489, 3
      %v522 = vrot.slane %v494, 3
      %v523 = vsel %vm520, %v521, %v522
      %v524 = vrot.slane %v499, 3
      %v525 = vsel %vm520, %v522, %v524
      %vm526 = vcmask 523264
      %v527 = vsel %vm526, %v523, 0
      %v529 = vsel %vm526, %v525, 0
      %531 = vmatprep.subr.mxu0 0.0
      %532 = vmatpush1.msra.mxu0 %v502
      %533 = vmatprep.subr.mxu0 0.0
      %534 = vmatpush1.msra.mxu0 %v503
      %535 = vmatprep.subr.mxu0 0.0
      %536 = vmatpush1.msra.mxu0 %v504
      %537 = vmatprep.subr.mxu0 0.0
      %538 = vmatpush1.msra.mxu0 %v505
      %539 = vmatprep.subr.mxu0 0.0
      %540 = vmatpush1.msra.mxu0 %v506
      %541 = vmatprep.subr.mxu0 0.0
      %542 = vmatpush1.msra.mxu0 %v507
      %543 = vmatprep.subr.mxu0 0.0
      %544 = vmatpush1.msra.mxu0 %v508
      %545 = vmatprep.subr.mxu0 0.0
      %546 = vmatpush1.msra.mxu0 %v509
      %547 = vmatprep.subr.mxu0 0.0
      %548 = vmatpush1.msra.mxu0 0.0
      %549 = vmatprep.subr.mxu0 0.0
      %550 = vmatpush1.msra.mxu0 0.0
      %551 = vmatprep.subr.mxu0 0.0
      %552 = vmatpush1.msra.mxu0 0.0
      %553 = vmatprep.subr.mxu0 0.0
      %554 = vmatpush1.msra.mxu0 0.0
      %555 = vmatprep.subr.mxu0 0.0
      %556 = vmatpush1.msra.mxu0 0.0
      %557 = vmatprep.subr.mxu0 0.0
      %558 = vmatpush1.msra.mxu0 0.0
      %559 = vmatprep.subr.mxu0 0.0
      %560 = vmatpush1.msra.mxu0 0.0
      %561 = vmatprep.subr.mxu0 0.0
      %562 = vmatpush1.msra.mxu0 0.0
      %563 = vmatprep.subr.mxu0 0.0
      %564 = vmatpush1.msra.mxu0 0.0
      %565 = vmatprep.subr.mxu0 0.0
      %566 = vmatpush1.msra.mxu0 0.0
      %567 = vmatprep.subr.mxu0 0.0
      %568 = vmatpush1.msra.mxu0 0.0
      %569 = vmatprep.subr.mxu0 0.0
      %570 = vmatpush1.msra.mxu0 0.0
      %571 = vmatprep.subr.mxu0 0.0
      %572 = vmatpush1.msra.mxu0 0.0
      %573 = vmatprep.subr.mxu0 0.0
      %574 = vmatpush1.msra.mxu0 0.0
      %575 = vmatprep.subr.mxu0 0.0
      %576 = vmatpush1.msra.mxu0 0.0
      %577 = vmatprep.subr.mxu0 0.0
      %578 = vmatpush1.msra.mxu0 0.0
      %579 = vmatprep.subr.mxu0 0.0
      %580 = vmatpush1.msra.mxu0 0.0
      %581 = vmatprep.subr.mxu0 0.0
      %582 = vmatpush1.msra.mxu0 0.0
      %583 = vmatprep.subr.mxu0 0.0
      %584 = vmatpush1.msra.mxu0 0.0
      %585 = vmatprep.subr.mxu0 0.0
      %586 = vmatpush1.msra.mxu0 0.0
      %587 = vmatprep.subr.mxu0 0.0
      %588 = vmatpush1.msra.mxu0 0.0
      %589 = vmatprep.subr.mxu0 0.0
      %590 = vmatpush1.msra.mxu0 0.0
      %591 = vmatprep.subr.mxu0 0.0
      %592 = vmatpush1.msra.mxu0 0.0
      %593 = vmatprep.subr.mxu0 0.0
      %594 = vmatpush1.msra.mxu0 0.0
      %595 = vmatprep.mubr.f32.mxu0 0.0
      %596 = vmatmul.mubr.f32.gmra.mrb[0].mxu0 %v527
      %v597 = vpop.f32.mrb[0].mxu0
      %v598 = vadd.f32 %v515, %v597
      %v599 = vpop.f32.mrb[0].mxu0
      %600 = vmatprep.mubr.f32.mxu0 0.0
      %601 = vmatmul.mubr.f32.gmra.mrb[0].mxu0 %v529
      %v602 = vpop.f32.mrb[0].mxu0
      %v603 = vadd.f32 %v515, %v602
      %v604 = vpop.f32.mrb[0].mxu0
      %605 = vdwg.mxu0
      %v606 = vld [vmem:[%s5] sm:$0xff]
      %v607 = vld [vmem:[%s5 + $0x8] sm:$0xff]
      %v608 = vld [vmem:[%s5 + $0x10] sm:$0xff]
      %v609 = vld [vmem:[%s5 + $0x18] sm:$0xff]
      %v610 = vld [vmem:[%s5 + $0x20] sm:$0xff]
      %v611 = vld [vmem:[%s5 + $0x28] sm:$0xff]
      %v612 = vld [vmem:[%s5 + $0x30] sm:$0xff]
      %v613 = vld [vmem:[%s5 + $0x38] sm:$0xff]
      %s614 = scalar_lea.vmem %s5, 64
      %v615 = vld [vmem:[%s614] sm:$0xff]
      %v616 = vld [vmem:[%s614 + $0x8] sm:$0xff]
      %v617 = vld [vmem:[%s614 + $0x10] sm:$0xff]
      %v618 = vld [vmem:[%s614 + $0x18] sm:$0xff]
      %v619 = vld [vmem:[%s614 + $0x20] sm:$0xff]
      %v620 = vld [vmem:[%s614 + $0x28] sm:$0xff]
      %v621 = vld [vmem:[%s614 + $0x30] sm:$0xff]
      %v622 = vld [vmem:[%s614 + $0x38] sm:$0xff]
      %vm623 = vcmask 1046528
      %v624 = vrot.slane %v489, 1
      %v625 = vrot.slane %v494, 1
      %v626 = vsel %vm623, %v624, %v625
      %v627 = vrot.slane %v499, 1
      %v628 = vsel %vm623, %v625, %v627
      %v629 = vsel %vm526, %v626, 0
      %v631 = vsel %vm526, %v628, 0
      %v633 = vsel %vm526, %v627, 0
      %635 = vmatprep.subr.mxu0 0.0
      %636 = vmatpush1.msra.mxu0 %v615
      %637 = vmatprep.subr.mxu0 0.0
      %638 = vmatpush1.msra.mxu0 %v616
      %639 = vmatprep.subr.mxu0 0.0
      %640 = vmatpush1.msra.mxu0 %v617
      %641 = vmatprep.subr.mxu0 0.0
      %642 = vmatpush1.msra.mxu0 %v618
      %643 = vmatprep.subr.mxu0 0.0
      %644 = vmatpush1.msra.mxu0 %v619
      %645 = vmatprep.subr.mxu0 0.0
      %646 = vmatpush1.msra.mxu0 %v620
      %647 = vmatprep.subr.mxu0 0.0
      %648 = vmatpush1.msra.mxu0 %v621
      %649 = vmatprep.subr.mxu0 0.0
      %650 = vmatpush1.msra.mxu0 %v622
      %651 = vmatprep.subr.mxu0 0.0
      %652 = vmatpush1.msra.mxu0 0.0
      %653 = vmatprep.subr.mxu0 0.0
      %654 = vmatpush1.msra.mxu0 0.0
      %655 = vmatprep.subr.mxu0 0.0
      %656 = vmatpush1.msra.mxu0 0.0
      %657 = vmatprep.subr.mxu0 0.0
      %658 = vmatpush1.msra.mxu0 0.0
      %659 = vmatprep.subr.mxu0 0.0
      %660 = vmatpush1.msra.mxu0 0.0
      %661 = vmatprep.subr.mxu0 0.0
      %662 = vmatpush1.msra.mxu0 0.0
      %663 = vmatprep.subr.mxu0 0.0
      %664 = vmatpush1.msra.mxu0 0.0
      %665 = vmatprep.subr.mxu0 0.0
      %666 = vmatpush1.msra.mxu0 0.0
      %667 = vmatprep.subr.mxu0 0.0
      %668 = vmatpush1.msra.mxu0 0.0
      %669 = vmatprep.subr.mxu0 0.0
      %670 = vmatpush1.msra.mxu0 0.0
      %671 = vmatprep.subr.mxu0 0.0
      %672 = vmatpush1.msra.mxu0 0.0
      %673 = vmatprep.subr.mxu0 0.0
      %674 = vmatpush1.msra.mxu0 0.0
      %675 = vmatprep.subr.mxu0 0.0
      %676 = vmatpush1.msra.mxu0 0.0
      %677 = vmatprep.subr.mxu0 0.0
      %678 = vmatpush1.msra.mxu0 0.0
      %679 = vmatprep.subr.mxu0 0.0
      %680 = vmatpush1.msra.mxu0 0.0
      %681 = vmatprep.subr.mxu0 0.0
      %682 = vmatpush1.msra.mxu0 0.0
      %683 = vmatprep.subr.mxu0 0.0
      %684 = vmatpush1.msra.mxu0 0.0
      %685 = vmatprep.subr.mxu0 0.0
      %686 = vmatpush1.msra.mxu0 0.0
      %687 = vmatprep.subr.mxu0 0.0
      %688 = vmatpush1.msra.mxu0 0.0
      %689 = vmatprep.subr.mxu0 0.0
      %690 = vmatpush1.msra.mxu0 0.0
      %691 = vmatprep.subr.mxu0 0.0
      %692 = vmatpush1.msra.mxu0 0.0
      %693 = vmatprep.subr.mxu0 0.0
      %694 = vmatpush1.msra.mxu0 0.0
      %695 = vmatprep.subr.mxu0 0.0
      %696 = vmatpush1.msra.mxu0 0.0
      %697 = vmatprep.subr.mxu0 0.0
      %698 = vmatpush1.msra.mxu0 0.0
      %699 = vmatprep.mubr.f32.mxu0 0.0
      %700 = vmatmul.mubr.f32.gmra.mrb[0].mxu0 %v629
      %v701 = vpop.f32.mrb[0].mxu0
      %v702 = vadd.f32 0.0, %v701
      %v703 = vpop.f32.mrb[0].mxu0
      %704 = vmatprep.mubr.f32.mxu0 0.0
      %705 = vmatmul.mubr.f32.gmra.mrb[0].mxu0 %v631
      %v706 = vpop.f32.mrb[0].mxu0
      %v707 = vadd.f32 0.0, %v706
      %v708 = vpop.f32.mrb[0].mxu0
      %709 = vmatprep.mubr.f32.mxu0 0.0
      %710 = vmatmul.mubr.f32.gmra.mrb[0].mxu0 %v633
      %v711 = vpop.f32.mrb[0].mxu0
      %v712 = vadd.f32 0.0, %v711
      %v713 = vpop.f32.mrb[0].mxu0
      %714 = vdwg.mxu0
      %v715 = vsel %vm526, %v489, 0
      %v717 = vsel %vm526, %v494, 0
      %v719 = vsel %vm526, %v499, 0
      %721 = vmatprep.subr.mxu0 0.0
      %722 = vmatpush1.msra.mxu0 %v606
      %723 = vmatprep.subr.mxu0 0.0
      %724 = vmatpush1.msra.mxu0 %v607
      %725 = vmatprep.subr.mxu0 0.0
      %726 = vmatpush1.msra.mxu0 %v608
      %727 = vmatprep.subr.mxu0 0.0
      %728 = vmatpush1.msra.mxu0 %v609
      %729 = vmatprep.subr.mxu0 0.0
      %730 = vmatpush1.msra.mxu0 %v610
      %731 = vmatprep.subr.mxu0 0.0
      %732 = vmatpush1.msra.mxu0 %v611
      %733 = vmatprep.subr.mxu0 0.0
      %734 = vmatpush1.msra.mxu0 %v612
      %735 = vmatprep.subr.mxu0 0.0
      %736 = vmatpush1.msra.mxu0 %v613
      %737 = vmatprep.subr.mxu0 0.0
      %738 = vmatpush1.msra.mxu0 0.0
      %739 = vmatprep.subr.mxu0 0.0
      %740 = vmatpush1.msra.mxu0 0.0
      %741 = vmatprep.subr.mxu0 0.0
      %742 = vmatpush1.msra.mxu0 0.0
      %743 = vmatprep.subr.mxu0 0.0
      %744 = vmatpush1.msra.mxu0 0.0
      %745 = vmatprep.subr.mxu0 0.0
      %746 = vmatpush1.msra.mxu0 0.0
      %747 = vmatprep.subr.mxu0 0.0
      %748 = vmatpush1.msra.mxu0 0.0
      %749 = vmatprep.subr.mxu0 0.0
      %750 = vmatpush1.msra.mxu0 0.0
      %751 = vmatprep.subr.mxu0 0.0
      %752 = vmatpush1.msra.mxu0 0.0
      %753 = vmatprep.subr.mxu0 0.0
      %754 = vmatpush1.msra.mxu0 0.0
      %755 = vmatprep.subr.mxu0 0.0
      %756 = vmatpush1.msra.mxu0 0.0
      %757 = vmatprep.subr.mxu0 0.0
      %758 = vmatpush1.msra.mxu0 0.0
      %759 = vmatprep.subr.mxu0 0.0
      %760 = vmatpush1.msra.mxu0 0.0
      %761 = vmatprep.subr.mxu0 0.0
      %762 = vmatpush1.msra.mxu0 0.0
      %763 = vmatprep.subr.mxu0 0.0
      %764 = vmatpush1.msra.mxu0 0.0
      %765 = vmatprep.subr.mxu0 0.0
      %766 = vmatpush1.msra.mxu0 0.0
      %767 = vmatprep.subr.mxu0 0.0
      %768 = vmatpush1.msra.mxu0 0.0
      %769 = vmatprep.subr.mxu0 0.0
      %770 = vmatpush1.msra.mxu0 0.0
      %771 = vmatprep.subr.mxu0 0.0
      %772 = vmatpush1.msra.mxu0 0.0
      %773 = vmatprep.subr.mxu0 0.0
      %774 = vmatpush1.msra.mxu0 0.0
      %775 = vmatprep.subr.mxu0 0.0
      %776 = vmatpush1.msra.mxu0 0.0
      %777 = vmatprep.subr.mxu0 0.0
      %778 = vmatpush1.msra.mxu0 0.0
      %779 = vmatprep.subr.mxu0 0.0
      %780 = vmatpush1.msra.mxu0 0.0
      %781 = vmatprep.subr.mxu0 0.0
      %782 = vmatpush1.msra.mxu0 0.0
      %783 = vmatprep.subr.mxu0 0.0
      %784 = vmatpush1.msra.mxu0 0.0
      %785 = vmatprep.mubr.f32.mxu0 0.0
      %786 = vmatmul.mubr.f32.gmra.mrb[0].mxu0 %v715
      %v787 = vpop.f32.mrb[0].mxu0
      %v788 = vadd.f32 %v702, %v787
      %v789 = vpop.f32.mrb[0].mxu0
      %790 = vmatprep.mubr.f32.mxu0 0.0
      %791 = vmatmul.mubr.f32.gmra.mrb[0].mxu0 %v717
      %v792 = vpop.f32.mrb[0].mxu0
      %v793 = vadd.f32 %v707, %v792
      %v794 = vpop.f32.mrb[0].mxu0
      %795 = vmatprep.mubr.f32.mxu0 0.0
      %796 = vmatmul.mubr.f32.gmra.mrb[0].mxu0 %v719
      %v797 = vpop.f32.mrb[0].mxu0
      %v798 = vadd.f32 %v712, %v797
      %v799 = vpop.f32.mrb[0].mxu0
      %800 = vdwg.mxu0
      %s801 = scalar_lea.vmem %s5, 128
      %v802 = vld [vmem:[%s801] sm:$0xff]
      %v803 = vld [vmem:[%s801 + $0x8] sm:$0xff]
      %v804 = vld [vmem:[%s801 + $0x10] sm:$0xff]
      %v805 = vld [vmem:[%s801 + $0x18] sm:$0xff]
      %v806 = vld [vmem:[%s801 + $0x20] sm:$0xff]
      %v807 = vld [vmem:[%s801 + $0x28] sm:$0xff]
      %v808 = vld [vmem:[%s801 + $0x30] sm:$0xff]
      %v809 = vld [vmem:[%s801 + $0x38] sm:$0xff]
      %vm810 = vcmask 1045504
      %v811 = vrot.slane %v489, 2
      %v812 = vrot.slane %v494, 2
      %v813 = vsel %vm810, %v811, %v812
      %v814 = vrot.slane %v499, 2
      %v815 = vsel %vm810, %v812, %v814
      %v816 = vsel %vm526, %v813, 0
      %v818 = vsel %vm526, %v815, 0
      %v820 = vsel %vm526, %v814, 0
      %822 = vmatprep.subr.mxu0 0.0
      %823 = vmatpush1.msra.mxu0 %v802
      %824 = vmatprep.subr.mxu0 0.0
      %825 = vmatpush1.msra.mxu0 %v803
      %826 = vmatprep.subr.mxu0 0.0
      %827 = vmatpush1.msra.mxu0 %v804
      %828 = vmatprep.subr.mxu0 0.0
      %829 = vmatpush1.msra.mxu0 %v805
      %830 = vmatprep.subr.mxu0 0.0
      %831 = vmatpush1.msra.mxu0 %v806
      %832 = vmatprep.subr.mxu0 0.0
      %833 = vmatpush1.msra.mxu0 %v807
      %834 = vmatprep.subr.mxu0 0.0
      %835 = vmatpush1.msra.mxu0 %v808
      %836 = vmatprep.subr.mxu0 0.0
      %837 = vmatpush1.msra.mxu0 %v809
      %838 = vmatprep.subr.mxu0 0.0
      %839 = vmatpush1.msra.mxu0 0.0
      %840 = vmatprep.subr.mxu0 0.0
      %841 = vmatpush1.msra.mxu0 0.0
      %842 = vmatprep.subr.mxu0 0.0
      %843 = vmatpush1.msra.mxu0 0.0
      %844 = vmatprep.subr.mxu0 0.0
      %845 = vmatpush1.msra.mxu0 0.0
      %846 = vmatprep.subr.mxu0 0.0
      %847 = vmatpush1.msra.mxu0 0.0
      %848 = vmatprep.subr.mxu0 0.0
      %849 = vmatpush1.msra.mxu0 0.0
      %850 = vmatprep.subr.mxu0 0.0
      %851 = vmatpush1.msra.mxu0 0.0
      %852 = vmatprep.subr.mxu0 0.0
      %853 = vmatpush1.msra.mxu0 0.0
      %854 = vmatprep.subr.mxu0 0.0
      %855 = vmatpush1.msra.mxu0 0.0
      %856 = vmatprep.subr.mxu0 0.0
      %857 = vmatpush1.msra.mxu0 0.0
      %858 = vmatprep.subr.mxu0 0.0
      %859 = vmatpush1.msra.mxu0 0.0
      %860 = vmatprep.subr.mxu0 0.0
      %861 = vmatpush1.msra.mxu0 0.0
      %862 = vmatprep.subr.mxu0 0.0
      %863 = vmatpush1.msra.mxu0 0.0
      %864 = vmatprep.subr.mxu0 0.0
      %865 = vmatpush1.msra.mxu0 0.0
      %866 = vmatprep.subr.mxu0 0.0
      %867 = vmatpush1.msra.mxu0 0.0
      %868 = vmatprep.subr.mxu0 0.0
      %869 = vmatpush1.msra.mxu0 0.0
      %870 = vmatprep.subr.mxu0 0.0
      %871 = vmatpush1.msra.mxu0 0.0
      %872 = vmatprep.subr.mxu0 0.0
      %873 = vmatpush1.msra.mxu0 0.0
      %874 = vmatprep.subr.mxu0 0.0
      %875 = vmatpush1.msra.mxu0 0.0
      %876 = vmatprep.subr.mxu0 0.0
      %877 = vmatpush1.msra.mxu0 0.0
      %878 = vmatprep.subr.mxu0 0.0
      %879 = vmatpush1.msra.mxu0 0.0
      %880 = vmatprep.subr.mxu0 0.0
      %881 = vmatpush1.msra.mxu0 0.0
      %882 = vmatprep.subr.mxu0 0.0
      %883 = vmatpush1.msra.mxu0 0.0
      %884 = vmatprep.subr.mxu0 0.0
      %885 = vmatpush1.msra.mxu0 0.0
      %886 = vmatprep.mubr.f32.mxu0 0.0
      %887 = vmatmul.mubr.f32.gmra.mrb[0].mxu0 %v816
      %v888 = vpop.f32.mrb[0].mxu0
      %v889 = vadd.f32 0.0, %v888
      %v890 = vpop.f32.mrb[0].mxu0
      %891 = vmatprep.mubr.f32.mxu0 0.0
      %892 = vmatmul.mubr.f32.gmra.mrb[0].mxu0 %v818
      %v893 = vpop.f32.mrb[0].mxu0
      %v894 = vadd.f32 0.0, %v893
      %v895 = vpop.f32.mrb[0].mxu0
      %896 = vmatprep.mubr.f32.mxu0 0.0
      %897 = vmatmul.mubr.f32.gmra.mrb[0].mxu0 %v820
      %v898 = vpop.f32.mrb[0].mxu0
      %v899 = vadd.f32 0.0, %v898
      %v900 = vpop.f32.mrb[0].mxu0
      %901 = vdwg.mxu0
      %v902 = vadd.f32 %v788, %v889
      %v903 = vadd.f32 %v793, %v894
      %v904 = vadd.f32 %v798, %v899
      %s905 = scalar_lea.vmem %s5, 192
      %v906 = vld [vmem:[%s905] sm:$0xff]
      %v907 = vld [vmem:[%s905 + $0x8] sm:$0xff]
      %v908 = vld [vmem:[%s905 + $0x10] sm:$0xff]
      %v909 = vld [vmem:[%s905 + $0x18] sm:$0xff]
      %v910 = vld [vmem:[%s905 + $0x20] sm:$0xff]
      %v911 = vld [vmem:[%s905 + $0x28] sm:$0xff]
      %v912 = vld [vmem:[%s905 + $0x30] sm:$0xff]
      %v913 = vld [vmem:[%s905 + $0x38] sm:$0xff]
      %v914 = vsel %vm526, %v524, 0
      %916 = vmatprep.subr.mxu0 0.0
      %917 = vmatpush1.msra.mxu0 %v906
      %918 = vmatprep.subr.mxu0 0.0
      %919 = vmatpush1.msra.mxu0 %v907
      %920 = vmatprep.subr.mxu0 0.0
      %921 = vmatpush1.msra.mxu0 %v908
      %922 = vmatprep.subr.mxu0 0.0
      %923 = vmatpush1.msra.mxu0 %v909
      %924 = vmatprep.subr.mxu0 0.0
      %925 = vmatpush1.msra.mxu0 %v910
      %926 = vmatprep.subr.mxu0 0.0
      %927 = vmatpush1.msra.mxu0 %v911
      %928 = vmatprep.subr.mxu0 0.0
      %929 = vmatpush1.msra.mxu0 %v912
      %930 = vmatprep.subr.mxu0 0.0
      %931 = vmatpush1.msra.mxu0 %v913
      %932 = vmatprep.subr.mxu0 0.0
      %933 = vmatpush1.msra.mxu0 0.0
      %934 = vmatprep.subr.mxu0 0.0
      %935 = vmatpush1.msra.mxu0 0.0
      %936 = vmatprep.subr.mxu0 0.0
      %937 = vmatpush1.msra.mxu0 0.0
      %938 = vmatprep.subr.mxu0 0.0
      %939 = vmatpush1.msra.mxu0 0.0
      %940 = vmatprep.subr.mxu0 0.0
      %941 = vmatpush1.msra.mxu0 0.0
      %942 = vmatprep.subr.mxu0 0.0
      %943 = vmatpush1.msra.mxu0 0.0
      %944 = vmatprep.subr.mxu0 0.0
      %945 = vmatpush1.msra.mxu0 0.0
      %946 = vmatprep.subr.mxu0 0.0
      %947 = vmatpush1.msra.mxu0 0.0
      %948 = vmatprep.subr.mxu0 0.0
      %949 = vmatpush1.msra.mxu0 0.0
      %950 = vmatprep.subr.mxu0 0.0
      %951 = vmatpush1.msra.mxu0 0.0
      %952 = vmatprep.subr.mxu0 0.0
      %953 = vmatpush1.msra.mxu0 0.0
      %954 = vmatprep.subr.mxu0 0.0
      %955 = vmatpush1.msra.mxu0 0.0
      %956 = vmatprep.subr.mxu0 0.0
      %957 = vmatpush1.msra.mxu0 0.0
      %958 = vmatprep.subr.mxu0 0.0
      %959 = vmatpush1.msra.mxu0 0.0
      %960 = vmatprep.subr.mxu0 0.0
      %961 = vmatpush1.msra.mxu0 0.0
      %962 = vmatprep.subr.mxu0 0.0
      %963 = vmatpush1.msra.mxu0 0.0
      %964 = vmatprep.subr.mxu0 0.0
      %965 = vmatpush1.msra.mxu0 0.0
      %966 = vmatprep.subr.mxu0 0.0
      %967 = vmatpush1.msra.mxu0 0.0
      %968 = vmatprep.subr.mxu0 0.0
      %969 = vmatpush1.msra.mxu0 0.0
      %970 = vmatprep.subr.mxu0 0.0
      %971 = vmatpush1.msra.mxu0 0.0
      %972 = vmatprep.subr.mxu0 0.0
      %973 = vmatpush1.msra.mxu0 0.0
      %974 = vmatprep.subr.mxu0 0.0
      %975 = vmatpush1.msra.mxu0 0.0
      %976 = vmatprep.subr.mxu0 0.0
      %977 = vmatpush1.msra.mxu0 0.0
      %978 = vmatprep.subr.mxu0 0.0
      %979 = vmatpush1.msra.mxu0 0.0
      %980 = vmatprep.mubr.f32.mxu0 0.0
      %981 = vmatmul.mubr.f32.gmra.mrb[0].mxu0 %v527
      %v982 = vpop.f32.mrb[0].mxu0
      %v983 = vadd.f32 0.0, %v982
      %v984 = vpop.f32.mrb[0].mxu0
      %985 = vmatprep.mubr.f32.mxu0 0.0
      %986 = vmatmul.mubr.f32.gmra.mrb[0].mxu0 %v529
      %v987 = vpop.f32.mrb[0].mxu0
      %v988 = vadd.f32 0.0, %v987
      %v989 = vpop.f32.mrb[0].mxu0
      %990 = vmatprep.mubr.f32.mxu0 0.0
      %991 = vmatmul.mubr.f32.gmra.mrb[0].mxu0 %v914
      %v992 = vpop.f32.mrb[0].mxu0
      %v993 = vadd.f32 0.0, %v992
      %v994 = vpop.f32.mrb[0].mxu0
      %995 = vdwg.mxu0
      %v996 = vadd.f32 %v902, %v983
      %v997 = vadd.f32 %v903, %v988
      %v998 = vadd.f32 %v904, %v993
      %s999 = scalar_lea.vmem %s5, 256
      %v1000 = vld [vmem:[%s999] sm:$0xff]
      %v1001 = vld [vmem:[%s999 + $0x8] sm:$0xff]
      %v1002 = vld [vmem:[%s999 + $0x10] sm:$0xff]
      %v1003 = vld [vmem:[%s999 + $0x18] sm:$0xff]
      %v1004 = vld [vmem:[%s999 + $0x20] sm:$0xff]
      %v1005 = vld [vmem:[%s999 + $0x28] sm:$0xff]
      %v1006 = vld [vmem:[%s999 + $0x30] sm:$0xff]
      %v1007 = vld [vmem:[%s999 + $0x38] sm:$0xff]
      %vm1008 = vcmask 1043456
      %v1009 = vrot.slane %v489, 4
      %v1010 = vrot.slane %v494, 4
      %v1011 = vsel %vm1008, %v1009, %v1010
      %v1012 = vrot.slane %v499, 4
      %v1013 = vsel %vm1008, %v1010, %v1012
      %v1014 = vsel %vm526, %v1011, 0
      %v1016 = vsel %vm526, %v1013, 0
      %v1018 = vsel %vm526, %v1012, 0
      %1020 = vmatprep.subr.mxu0 0.0
      %1021 = vmatpush1.msra.mxu0 %v1000
      %1022 = vmatprep.subr.mxu0 0.0
      %1023 = vmatpush1.msra.mxu0 %v1001
      %1024 = vmatprep.subr.mxu0 0.0
      %1025 = vmatpush1.msra.mxu0 %v1002
      %1026 = vmatprep.subr.mxu0 0.0
      %1027 = vmatpush1.msra.mxu0 %v1003
      %1028 = vmatprep.subr.mxu0 0.0
      %1029 = vmatpush1.msra.mxu0 %v1004
      %1030 = vmatprep.subr.mxu0 0.0
      %1031 = vmatpush1.msra.mxu0 %v1005
      %1032 = vmatprep.subr.mxu0 0.0
      %1033 = vmatpush1.msra.mxu0 %v1006
      %1034 = vmatprep.subr.mxu0 0.0
      %1035 = vmatpush1.msra.mxu0 %v1007
      %1036 = vmatprep.subr.mxu0 0.0
      %1037 = vmatpush1.msra.mxu0 0.0
      %1038 = vmatprep.subr.mxu0 0.0
      %1039 = vmatpush1.msra.mxu0 0.0
      %1040 = vmatprep.subr.mxu0 0.0
      %1041 = vmatpush1.msra.mxu0 0.0
      %1042 = vmatprep.subr.mxu0 0.0
      %1043 = vmatpush1.msra.mxu0 0.0
      %1044 = vmatprep.subr.mxu0 0.0
      %1045 = vmatpush1.msra.mxu0 0.0
      %1046 = vmatprep.subr.mxu0 0.0
      %1047 = vmatpush1.msra.mxu0 0.0
      %1048 = vmatprep.subr.mxu0 0.0
      %1049 = vmatpush1.msra.mxu0 0.0
      %1050 = vmatprep.subr.mxu0 0.0
      %1051 = vmatpush1.msra.mxu0 0.0
      %1052 = vmatprep.subr.mxu0 0.0
      %1053 = vmatpush1.msra.mxu0 0.0
      %1054 = vmatprep.subr.mxu0 0.0
      %1055 = vmatpush1.msra.mxu0 0.0
      %1056 = vmatprep.subr.mxu0 0.0
      %1057 = vmatpush1.msra.mxu0 0.0
      %1058 = vmatprep.subr.mxu0 0.0
      %1059 = vmatpush1.msra.mxu0 0.0
      %1060 = vmatprep.subr.mxu0 0.0
      %1061 = vmatpush1.msra.mxu0 0.0
      %1062 = vmatprep.subr.mxu0 0.0
      %1063 = vmatpush1.msra.mxu0 0.0
      %1064 = vmatprep.subr.mxu0 0.0
      %1065 = vmatpush1.msra.mxu0 0.0
      %1066 = vmatprep.subr.mxu0 0.0
      %1067 = vmatpush1.msra.mxu0 0.0
      %1068 = vmatprep.subr.mxu0 0.0
      %1069 = vmatpush1.msra.mxu0 0.0
      %1070 = vmatprep.subr.mxu0 0.0
      %1071 = vmatpush1.msra.mxu0 0.0
      %1072 = vmatprep.subr.mxu0 0.0
      %1073 = vmatpush1.msra.mxu0 0.0
      %1074 = vmatprep.subr.mxu0 0.0
      %1075 = vmatpush1.msra.mxu0 0.0
      %1076 = vmatprep.subr.mxu0 0.0
      %1077 = vmatpush1.msra.mxu0 0.0
      %1078 = vmatprep.subr.mxu0 0.0
      %1079 = vmatpush1.msra.mxu0 0.0
      %1080 = vmatprep.subr.mxu0 0.0
      %1081 = vmatpush1.msra.mxu0 0.0
      %1082 = vmatprep.subr.mxu0 0.0
      %1083 = vmatpush1.msra.mxu0 0.0
      %1084 = vmatprep.mubr.f32.mxu0 0.0
      %1085 = vmatmul.mubr.f32.gmra.mrb[0].mxu0 %v1014
      %v1086 = vpop.f32.mrb[0].mxu0
      %v1087 = vadd.f32 0.0, %v1086
      %v1088 = vpop.f32.mrb[0].mxu0
      %1089 = vmatprep.mubr.f32.mxu0 0.0
      %1090 = vmatmul.mubr.f32.gmra.mrb[0].mxu0 %v1016
      %v1091 = vpop.f32.mrb[0].mxu0
      %v1092 = vadd.f32 0.0, %v1091
      %v1093 = vpop.f32.mrb[0].mxu0
      %1094 = vmatprep.mubr.f32.mxu0 0.0
      %1095 = vmatmul.mubr.f32.gmra.mrb[0].mxu0 %v1018
      %v1096 = vpop.f32.mrb[0].mxu0
      %v1097 = vadd.f32 0.0, %v1096
      %v1098 = vpop.f32.mrb[0].mxu0
      %1099 = vdwg.mxu0
      %v1100 = vadd.f32 %v996, %v1087
      %v1101 = vadd.f32 %v997, %v1092
      %v1102 = vadd.f32 %v998, %v1097
      %v1103 = vld [vmem:[%s6] sm:$0x1]
      %v1105 = vlaneseq
      %v1106 = vshrl.u32 %v1105, 7
      %v1107 = vsub.s32 0, %v1106
      %v1108 = vrot.slane %v1103, %v1107
      %v1110 = vadd.f32 %v1100, %v1108
      %v1111 = vadd.f32 %v1101, %v1108
      %v1112 = vadd.f32 %v1102, %v1108
      %vm1113 = vcmp.ge.f32.partialorder %v1110, 0.0
      %vm1114 = vcmp.ge.f32.partialorder %v1111, 0.0
      %vm1115 = vcmp.ge.f32.partialorder %v1112, 0.0
      %v1116 = vmul.f32 %v1110, 0.01
      %v1117 = vmul.f32 %v1111, 0.01
      %v1118 = vmul.f32 %v1112, 0.01
      %v1119 = vsel %vm1113, %v1110, %v1116
      %v1120 = vsel %vm1114, %v1111, %v1117
      %v1121 = vsel %vm1115, %v1112, %v1118
      %v1122 = vlaneseq
      %v1123 = vshrl.u32 %v1122, 7
      %v1124 = vadd.s32 %v1123, 8
      %v1125 = vadd.s32 %v1123, 16
      %vm1126 = vcmp.eq.s32.totalorder %v1123, 0
      %vm1127 = vcmp.eq.s32.totalorder %v1124, 0
      %vm1128 = vcmp.eq.s32.totalorder %v1125, 0
      %vm1129 = vcmp.eq.s32.totalorder %v1123, 17
      %vm1130 = vcmp.eq.s32.totalorder %v1124, 17
      %vm1131 = vcmp.eq.s32.totalorder %v1125, 17
      %vm1132 = vmor %vm1126, %vm1129
      %vm1133 = vmor %vm1127, %vm1130
      %vm1134 = vmor %vm1128, %vm1131
      %v1135 = vsel %vm1132, 0.0, %v1119
      %v1136 = vsel %vm1133, 0.0, %v1120
      %v1137 = vsel %vm1134, 0.0, %v1121
      %v1138 = vld [vmem:[%s7] sm:$0xff]
      %v1139 = vld [vmem:[%s7 + $0x8] sm:$0xff]
      %v1140 = vld [vmem:[%s7 + $0x10] sm:$0xff]
      %v1141 = vld [vmem:[%s7 + $0x18] sm:$0xff]
      %v1142 = vld [vmem:[%s7 + $0x20] sm:$0xff]
      %v1143 = vld [vmem:[%s7 + $0x28] sm:$0xff]
      %v1144 = vld [vmem:[%s7 + $0x30] sm:$0xff]
      %v1145 = vld [vmem:[%s7 + $0x38] sm:$0xff]
      %v1146 = vld [vmem:[%s7 + $0x40] sm:$0xff]
      %v1147 = vld [vmem:[%s7 + $0x48] sm:$0xff]
      %v1148 = vld [vmem:[%s7 + $0x50] sm:$0xff]
      %v1149 = vld [vmem:[%s7 + $0x58] sm:$0xff]
      %v1150 = vld [vmem:[%s7 + $0x60] sm:$0xff]
      %v1151 = vld [vmem:[%s7 + $0x68] sm:$0xff]
      %v1152 = vld [vmem:[%s7 + $0x70] sm:$0xff]
      %v1153 = vld [vmem:[%s7 + $0x78] sm:$0xff]
      %s1154 = scalar_lea.vmem %s7, 128
      %v1155 = vld [vmem:[%s1154] sm:$0xff]
      %v1156 = vld [vmem:[%s1154 + $0x8] sm:$0xff]
      %v1157 = vld [vmem:[%s1154 + $0x10] sm:$0xff]
      %v1158 = vld [vmem:[%s1154 + $0x18] sm:$0xff]
      %v1159 = vld [vmem:[%s1154 + $0x20] sm:$0xff]
      %v1160 = vld [vmem:[%s1154 + $0x28] sm:$0xff]
      %v1161 = vld [vmem:[%s1154 + $0x30] sm:$0xff]
      %v1162 = vld [vmem:[%s1154 + $0x38] sm:$0xff]
      %v1163 = vld [vmem:[%s1154 + $0x40] sm:$0xff]
      %v1164 = vld [vmem:[%s1154 + $0x48] sm:$0xff]
      %v1165 = vld [vmem:[%s1154 + $0x50] sm:$0xff]
      %v1166 = vld [vmem:[%s1154 + $0x58] sm:$0xff]
      %v1167 = vld [vmem:[%s1154 + $0x60] sm:$0xff]
      %v1168 = vld [vmem:[%s1154 + $0x68] sm:$0xff]
      %v1169 = vld [vmem:[%s1154 + $0x70] sm:$0xff]
      %v1170 = vld [vmem:[%s1154 + $0x78] sm:$0xff]
      %v1174 = vrot.slane %v1135, 1
      %v1175 = vrot.slane %v1136, 1
      %v1176 = vsel %vm623, %v1174, %v1175
      %v1177 = vrot.slane %v1137, 1
      %v1178 = vsel %vm623, %v1175, %v1177
      %1181 = vmatprep.subr.mxu0 0.0
      %1182 = vmatpush1.msra.mxu0 %v1155
      %1183 = vmatprep.subr.mxu0 0.0
      %1184 = vmatpush1.msra.mxu0 %v1156
      %1185 = vmatprep.subr.mxu0 0.0
      %1186 = vmatpush1.msra.mxu0 %v1157
      %1187 = vmatprep.subr.mxu0 0.0
      %1188 = vmatpush1.msra.mxu0 %v1158
      %1189 = vmatprep.subr.mxu0 0.0
      %1190 = vmatpush1.msra.mxu0 %v1159
      %1191 = vmatprep.subr.mxu0 0.0
      %1192 = vmatpush1.msra.mxu0 %v1160
      %1193 = vmatprep.subr.mxu0 0.0
      %1194 = vmatpush1.msra.mxu0 %v1161
      %1195 = vmatprep.subr.mxu0 0.0
      %1196 = vmatpush1.msra.mxu0 %v1162
      %1197 = vmatprep.subr.mxu0 0.0
      %1198 = vmatpush1.msra.mxu0 %v1163
      %1199 = vmatprep.subr.mxu0 0.0
      %1200 = vmatpush1.msra.mxu0 %v1164
      %1201 = vmatprep.subr.mxu0 0.0
      %1202 = vmatpush1.msra.mxu0 %v1165
      %1203 = vmatprep.subr.mxu0 0.0
      %1204 = vmatpush1.msra.mxu0 %v1166
      %1205 = vmatprep.subr.mxu0 0.0
      %1206 = vmatpush1.msra.mxu0 %v1167
      %1207 = vmatprep.subr.mxu0 0.0
      %1208 = vmatpush1.msra.mxu0 %v1168
      %1209 = vmatprep.subr.mxu0 0.0
      %1210 = vmatpush1.msra.mxu0 %v1169
      %1211 = vmatprep.subr.mxu0 0.0
      %1212 = vmatpush1.msra.mxu0 %v1170
      %1213 = vmatprep.subr.mxu0 0.0
      %1214 = vmatpush1.msra.mxu0 0.0
      %1215 = vmatprep.subr.mxu0 0.0
      %1216 = vmatpush1.msra.mxu0 0.0
      %1217 = vmatprep.subr.mxu0 0.0
      %1218 = vmatpush1.msra.mxu0 0.0
      %1219 = vmatprep.subr.mxu0 0.0
      %1220 = vmatpush1.msra.mxu0 0.0
      %1221 = vmatprep.subr.mxu0 0.0
      %1222 = vmatpush1.msra.mxu0 0.0
      %1223 = vmatprep.subr.mxu0 0.0
      %1224 = vmatpush1.msra.mxu0 0.0
      %1225 = vmatprep.subr.mxu0 0.0
      %1226 = vmatpush1.msra.mxu0 0.0
      %1227 = vmatprep.subr.mxu0 0.0
      %1228 = vmatpush1.msra.mxu0 0.0
      %1229 = vmatprep.subr.mxu0 0.0
      %1230 = vmatpush1.msra.mxu0 0.0
      %1231 = vmatprep.subr.mxu0 0.0
      %1232 = vmatpush1.msra.mxu0 0.0
      %1233 = vmatprep.subr.mxu0 0.0
      %1234 = vmatpush1.msra.mxu0 0.0
      %1235 = vmatprep.subr.mxu0 0.0
      %1236 = vmatpush1.msra.mxu0 0.0
      %1237 = vmatprep.subr.mxu0 0.0
      %1238 = vmatpush1.msra.mxu0 0.0
      %1239 = vmatprep.subr.mxu0 0.0
      %1240 = vmatpush1.msra.mxu0 0.0
      %1241 = vmatprep.subr.mxu0 0.0
      %1242 = vmatpush1.msra.mxu0 0.0
      %1243 = vmatprep.subr.mxu0 0.0
      %1244 = vmatpush1.msra.mxu0 0.0
      %1245 = vmatprep.mubr.f32.mxu0 0.0
      %1246 = vmatmul.mubr.f32.gmra.mrb[0].mxu0 %v1176
      %v1247 = vpop.f32.mrb[0].mxu0
      %v1248 = vadd.f32 0.0, %v1247
      %v1249 = vpop.f32.mrb[0].mxu0
      %1250 = vmatprep.mubr.f32.mxu0 0.0
      %1251 = vmatmul.mubr.f32.gmra.mrb[0].mxu0 %v1178
      %v1252 = vpop.f32.mrb[0].mxu0
      %v1253 = vadd.f32 0.0, %v1252
      %v1254 = vpop.f32.mrb[0].mxu0
      %1255 = vdwg.mxu0
      %1256 = vmatprep.subr.mxu0 0.0
      %1257 = vmatpush1.msra.mxu0 %v1138
      %1258 = vmatprep.subr.mxu0 0.0
      %1259 = vmatpush1.msra.mxu0 %v1139
      %1260 = vmatprep.subr.mxu0 0.0
      %1261 = vmatpush1.msra.mxu0 %v1140
      %1262 = vmatprep.subr.mxu0 0.0
      %1263 = vmatpush1.msra.mxu0 %v1141
      %1264 = vmatprep.subr.mxu0 0.0
      %1265 = vmatpush1.msra.mxu0 %v1142
      %1266 = vmatprep.subr.mxu0 0.0
      %1267 = vmatpush1.msra.mxu0 %v1143
      %1268 = vmatprep.subr.mxu0 0.0
      %1269 = vmatpush1.msra.mxu0 %v1144
      %1270 = vmatprep.subr.mxu0 0.0
      %1271 = vmatpush1.msra.mxu0 %v1145
      %1272 = vmatprep.subr.mxu0 0.0
      %1273 = vmatpush1.msra.mxu0 %v1146
      %1274 = vmatprep.subr.mxu0 0.0
      %1275 = vmatpush1.msra.mxu0 %v1147
      %1276 = vmatprep.subr.mxu0 0.0
      %1277 = vmatpush1.msra.mxu0 %v1148
      %1278 = vmatprep.subr.mxu0 0.0
      %1279 = vmatpush1.msra.mxu0 %v1149
      %1280 = vmatprep.subr.mxu0 0.0
      %1281 = vmatpush1.msra.mxu0 %v1150
      %1282 = vmatprep.subr.mxu0 0.0
      %1283 = vmatpush1.msra.mxu0 %v1151
      %1284 = vmatprep.subr.mxu0 0.0
      %1285 = vmatpush1.msra.mxu0 %v1152
      %1286 = vmatprep.subr.mxu0 0.0
      %1287 = vmatpush1.msra.mxu0 %v1153
      %1288 = vmatprep.subr.mxu0 0.0
      %1289 = vmatpush1.msra.mxu0 0.0
      %1290 = vmatprep.subr.mxu0 0.0
      %1291 = vmatpush1.msra.mxu0 0.0
      %1292 = vmatprep.subr.mxu0 0.0
      %1293 = vmatpush1.msra.mxu0 0.0
      %1294 = vmatprep.subr.mxu0 0.0
      %1295 = vmatpush1.msra.mxu0 0.0
      %1296 = vmatprep.subr.mxu0 0.0
      %1297 = vmatpush1.msra.mxu0 0.0
      %1298 = vmatprep.subr.mxu0 0.0
      %1299 = vmatpush1.msra.mxu0 0.0
      %1300 = vmatprep.subr.mxu0 0.0
      %1301 = vmatpush1.msra.mxu0 0.0
      %1302 = vmatprep.subr.mxu0 0.0
      %1303 = vmatpush1.msra.mxu0 0.0
      %1304 = vmatprep.subr.mxu0 0.0
      %1305 = vmatpush1.msra.mxu0 0.0
      %1306 = vmatprep.subr.mxu0 0.0
      %1307 = vmatpush1.msra.mxu0 0.0
      %1308 = vmatprep.subr.mxu0 0.0
      %1309 = vmatpush1.msra.mxu0 0.0
      %1310 = vmatprep.subr.mxu0 0.0
      %1311 = vmatpush1.msra.mxu0 0.0
      %1312 = vmatprep.subr.mxu0 0.0
      %1313 = vmatpush1.msra.mxu0 0.0
      %1314 = vmatprep.subr.mxu0 0.0
      %1315 = vmatpush1.msra.mxu0 0.0
      %1316 = vmatprep.subr.mxu0 0.0
      %1317 = vmatpush1.msra.mxu0 0.0
      %1318 = vmatprep.subr.mxu0 0.0
      %1319 = vmatpush1.msra.mxu0 0.0
      %1320 = vmatprep.mubr.f32.mxu0 0.0
      %1321 = vmatmul.mubr.f32.gmra.mrb[0].mxu0 %v1135
      %v1322 = vpop.f32.mrb[0].mxu0
      %v1323 = vadd.f32 %v1248, %v1322
      %v1324 = vpop.f32.mrb[0].mxu0
      %1325 = vmatprep.mubr.f32.mxu0 0.0
      %1326 = vmatmul.mubr.f32.gmra.mrb[0].mxu0 %v1136
      %v1327 = vpop.f32.mrb[0].mxu0
      %v1328 = vadd.f32 %v1253, %v1327
      %v1329 = vpop.f32.mrb[0].mxu0
      %1330 = vdwg.mxu0
      %s1331 = scalar_lea.vmem %s7, 256
      %v1332 = vld [vmem:[%s1331] sm:$0xff]
      %v1333 = vld [vmem:[%s1331 + $0x8] sm:$0xff]
      %v1334 = vld [vmem:[%s1331 + $0x10] sm:$0xff]
      %v1335 = vld [vmem:[%s1331 + $0x18] sm:$0xff]
      %v1336 = vld [vmem:[%s1331 + $0x20] sm:$0xff]
      %v1337 = vld [vmem:[%s1331 + $0x28] sm:$0xff]
      %v1338 = vld [vmem:[%s1331 + $0x30] sm:$0xff]
      %v1339 = vld [vmem:[%s1331 + $0x38] sm:$0xff]
      %v1340 = vld [vmem:[%s1331 + $0x40] sm:$0xff]
      %v1341 = vld [vmem:[%s1331 + $0x48] sm:$0xff]
      %v1342 = vld [vmem:[%s1331 + $0x50] sm:$0xff]
      %v1343 = vld [vmem:[%s1331 + $0x58] sm:$0xff]
      %v1344 = vld [vmem:[%s1331 + $0x60] sm:$0xff]
      %v1345 = vld [vmem:[%s1331 + $0x68] sm:$0xff]
      %v1346 = vld [vmem:[%s1331 + $0x70] sm:$0xff]
      %v1347 = vld [vmem:[%s1331 + $0x78] sm:$0xff]
      %v1348 = vrot.slane %v1135, 2
      %v1349 = vrot.slane %v1136, 2
      %v1350 = vsel %vm810, %v1348, %v1349
      %v1351 = vrot.slane %v1137, 2
      %v1352 = vsel %vm810, %v1349, %v1351
      %1355 = vmatprep.subr.mxu0 0.0
      %1356 = vmatpush1.msra.mxu0 %v1332
      %1357 = vmatprep.subr.mxu0 0.0
      %1358 = vmatpush1.msra.mxu0 %v1333
      %1359 = vmatprep.subr.mxu0 0.0
      %1360 = vmatpush1.msra.mxu0 %v1334
      %1361 = vmatprep.subr.mxu0 0.0
      %1362 = vmatpush1.msra.mxu0 %v1335
      %1363 = vmatprep.subr.mxu0 0.0
      %1364 = vmatpush1.msra.mxu0 %v1336
      %1365 = vmatprep.subr.mxu0 0.0
      %1366 = vmatpush1.msra.mxu0 %v1337
      %1367 = vmatprep.subr.mxu0 0.0
      %1368 = vmatpush1.msra.mxu0 %v1338
      %1369 = vmatprep.subr.mxu0 0.0
      %1370 = vmatpush1.msra.mxu0 %v1339
      %1371 = vmatprep.subr.mxu0 0.0
      %1372 = vmatpush1.msra.mxu0 %v1340
      %1373 = vmatprep.subr.mxu0 0.0
      %1374 = vmatpush1.msra.mxu0 %v1341
      %1375 = vmatprep.subr.mxu0 0.0
      %1376 = vmatpush1.msra.mxu0 %v1342
      %1377 = vmatprep.subr.mxu0 0.0
      %1378 = vmatpush1.msra.mxu0 %v1343
      %1379 = vmatprep.subr.mxu0 0.0
      %1380 = vmatpush1.msra.mxu0 %v1344
      %1381 = vmatprep.subr.mxu0 0.0
      %1382 = vmatpush1.msra.mxu0 %v1345
      %1383 = vmatprep.subr.mxu0 0.0
      %1384 = vmatpush1.msra.mxu0 %v1346
      %1385 = vmatprep.subr.mxu0 0.0
      %1386 = vmatpush1.msra.mxu0 %v1347
      %1387 = vmatprep.subr.mxu0 0.0
      %1388 = vmatpush1.msra.mxu0 0.0
      %1389 = vmatprep.subr.mxu0 0.0
      %1390 = vmatpush1.msra.mxu0 0.0
      %1391 = vmatprep.subr.mxu0 0.0
      %1392 = vmatpush1.msra.mxu0 0.0
      %1393 = vmatprep.subr.mxu0 0.0
      %1394 = vmatpush1.msra.mxu0 0.0
      %1395 = vmatprep.subr.mxu0 0.0
      %1396 = vmatpush1.msra.mxu0 0.0
      %1397 = vmatprep.subr.mxu0 0.0
      %1398 = vmatpush1.msra.mxu0 0.0
      %1399 = vmatprep.subr.mxu0 0.0
      %1400 = vmatpush1.msra.mxu0 0.0
      %1401 = vmatprep.subr.mxu0 0.0
      %1402 = vmatpush1.msra.mxu0 0.0
      %1403 = vmatprep.subr.mxu0 0.0
      %1404 = vmatpush1.msra.mxu0 0.0
      %1405 = vmatprep.subr.mxu0 0.0
      %1406 = vmatpush1.msra.mxu0 0.0
      %1407 = vmatprep.subr.mxu0 0.0
      %1408 = vmatpush1.msra.mxu0 0.0
      %1409 = vmatprep.subr.mxu0 0.0
      %1410 = vmatpush1.msra.mxu0 0.0
      %1411 = vmatprep.subr.mxu0 0.0
      %1412 = vmatpush1.msra.mxu0 0.0
      %1413 = vmatprep.subr.mxu0 0.0
      %1414 = vmatpush1.msra.mxu0 0.0
      %1415 = vmatprep.subr.mxu0 0.0
      %1416 = vmatpush1.msra.mxu0 0.0
      %1417 = vmatprep.subr.mxu0 0.0
      %1418 = vmatpush1.msra.mxu0 0.0
      %1419 = vmatprep.mubr.f32.mxu0 0.0
      %1420 = vmatmul.mubr.f32.gmra.mrb[0].mxu0 %v1350
      %v1421 = vpop.f32.mrb[0].mxu0
      %v1422 = vadd.f32 0.0, %v1421
      %v1423 = vpop.f32.mrb[0].mxu0
      %1424 = vmatprep.mubr.f32.mxu0 0.0
      %1425 = vmatmul.mubr.f32.gmra.mrb[0].mxu0 %v1352
      %v1426 = vpop.f32.mrb[0].mxu0
      %v1427 = vadd.f32 0.0, %v1426
      %v1428 = vpop.f32.mrb[0].mxu0
      %1429 = vdwg.mxu0
      %v1430 = vadd.f32 %v1323, %v1422
      %v1431 = vadd.f32 %v1328, %v1427
      %v1432 = vld [vmem:[%s8] sm:$0x1]
      %v1434 = vlaneseq
      %v1435 = vshrl.u32 %v1434, 7
      %v1436 = vsub.s32 0, %v1435
      %v1437 = vrot.slane %v1432, %v1436
      %v1439 = vadd.f32 %v1430, %v1437
      %v1440 = vadd.f32 %v1431, %v1437
      %v1441 = vadd.f32 %v1439, %v598
      %v1442 = vadd.f32 %v1440, %v603
      %1443 = vst [vmem:[%s329] sm:$0xff] %v1441
      %1444 = vst [vmem:[%s329 + $0x8] sm:$0xff] %v1442
      %p1445 = scmp.lt.s32.totalorder %s20, 1
      %s1446 = scalar_select %p1445, %s20, 1
      %s1447 = smul.addr %s1446, 2
      %s1448 = smul.addr %s1447, 8
      %s1449 = scalar_lea.vmem %s9, %s1448
      // Predicated region
      $region57: #{upconv_block.1} parent=55 // pred_check
        %p1450 = pneg %p232
      $region58: #{upconv_block.1} parent=55 // pred_check_branch
        %1452 = sbr.rel (%p1450) target = $region60
      $region59: #{upconv_block.1} parent=55 // pred_region
        _
      $region60: #{upconv_block.1} parent=55 // pred_fallthru
        _
    $region56: #{upconv_block.1} parent=5 // pred_fallthru
      _
    %p1453 = scmp.le.s32.totalorder 2, %s15
    // Predicated region
    $region61: #{upconv_block.1} parent=5 // pred_check
      %p1454 = pneg %p1453
    $region62: #{upconv_block.1} parent=5 // pred_check_branch
      %1456 = sbr.rel (%p1454) target = $region64
    $region63: #{upconv_block.1} parent=5 // pred_region
      %s1457 = ssub.s32 %s15, 2
      // Predicated region
      $region65: #{upconv_block.1} parent=63 // pred_check
        %p1458 = pneg %p238
      $region66: #{upconv_block.1} parent=63 // pred_check_branch
        %1460 = sbr.rel (%p1458) target = $region68
      $region67: #{upconv_block.1} parent=63 // pred_region
        %p1461 = scmp.lt.s32.totalorder %s21, 1
        %s1462 = scalar_select %p1461, %s21, 1
        %s1463 = smul.addr %s1462, 2
        %s1464 = smul.addr %s1463, 8
        %s1465 = scalar_lea.vmem %s9, %s1464
      $region68: #{upconv_block.1} parent=63 // pred_fallthru
        _
    $region64: #{upconv_block.1} parent=5 // pred_fallthru
      _
  $region6: #{upconv_block.1} parent=0 // loop_footer
    %s19 = sadd.s32 1, %s15
  $region7: #{upconv_block.1} parent=0 // loop_footer_branch
    %14 = sbr.rel target = $region3
  $region8: #{upconv_block.1} parent=0 // loop_exit
    _

</llo_original>
